<compile_context>
chip_gen: v6e
topology: v6e:2x2x1
jax: 0.10.0
libtpu: 0.0.40
codegen_flags: <defaults>
</compile_context>

<pallas_src>
import jax
import jax.numpy as jnp
from jax import lax
from jax.experimental import pallas as pl
from jax.experimental.pallas import tpu as pltpu

KSIZE = 7
PAD = KSIZE // 2


def spatial_attention_kernel(wcat_ref, x_ref, o_ref):
    """Single-step kernel: whole batch, whole operator resident in VMEM.

    wcat_ref: (2F, F) bf16 conv-as-matmul operator, [W_sum ; W_max] stacked on the K axis
              (1/C of the channel mean already folded into the W_sum half).
    x_ref   : (N, C, F) input, lane-dense flattened spatial dim (F % 128 == 0 here).
    o_ref   : (N, C, F) output.
    """
    x = x_ref[...].astype(jnp.float32)                     # (N, C, F)
    s = jnp.sum(x, axis=1)                                 # (N, F) channel sum (mean via W_sum)
    m = jnp.max(x, axis=1)                                 # (N, F) channel max

    # Fused (N, 2F) @ (2F, F) MXU matmul, bf16 inputs, f32 accumulation.
    a = jnp.concatenate([s, m], axis=-1).astype(wcat_ref.dtype)   # (N, 2F)
    att = jnp.dot(a, wcat_ref[...], preferred_element_type=jnp.float32)  # (N, F)

    # sigmoid(att) * x + x  ==  x * (sigmoid(att) + 1)
    gate = jax.nn.sigmoid(att) + 1.0                       # (N, F)
    o_ref[...] = (x * gate[:, None, :]).astype(o_ref.dtype)


def build_spatial_attention_operator(conv_w, C, D, H, W, dtype=jnp.bfloat16):
    """Fold Conv3d(2->1, k=7, pad=3, no bias) into one dense (2F, F) operator, F = D*H*W.

    conv(stack([mean_c x, max_c x]))[o] == sum_f sum_c(x)[f]*Wsum[f,o] + max_c(x)[f]*Wmax[f,o]
    Out-of-range taps (implicit zero padding) become zero entries; the 1/C of the channel mean
    is folded into the W_sum half so the kernel only needs a channel sum.  Call this ONCE per
    weight update (it is hoisted out of the forward pass).
    """
    w = conv_w.reshape(2, KSIZE, KSIZE, KSIZE).astype(jnp.float32)

    def taps(n):
        # For input index i contributing to output index o along one axis: tap k = i - o + PAD.
        i = jnp.arange(n)
        off = i[:, None] - i[None, :] + PAD                # (n_in, n_out)
        valid = (off >= 0) & (off < KSIZE)
        return jnp.where(valid, off, 0), valid

    od, vd = taps(D)
    oh, vh = taps(H)
    ow, vw = taps(W)
    m = w[:, od[:, None, None, :, None, None],
             oh[None, :, None, None, :, None],
             ow[None, None, :, None, None, :]]             # (2, D, H, W, D, H, W)
    valid = (vd[:, None, None, :, None, None]
             & vh[None, :, None, None, :, None]
             & vw[None, None, :, None, None, :])           # (D, H, W, D, H, W)
    m = jnp.where(valid[None], m, 0.0)
    F = D * H * W
    m = m.reshape(2, F, F)
    w_sum = m[0] / jnp.float32(C)                          # fold 1/C of the channel mean
    w_max = m[1]
    return jnp.concatenate([w_sum, w_max], axis=0).astype(dtype)   # (2F, F)


@jax.jit
def spatial_attention_3d(x, w_cat):
    """x: (N, C, D, H, W); w_cat: (2*D*H*W, D*H*W) precomputed operator (bf16)."""
    N, C, D, H, W = x.shape
    F = D * H * W
    x_flat = x.reshape(N, C, F)                            # lane-dense last dim

    out_flat = pl.pallas_call(
        spatial_attention_kernel,
        out_shape=jax.ShapeDtypeStruct((N, C, F), x.dtype),
        # No grid: one step, whole arrays resident in VMEM (single-buffered, no pipeline
        # prologue/epilogue, no duplicated W DMA).  At N>=~8 a "parallel" batch grid axis
        # would become worthwhile again.
        in_specs=[
            pl.BlockSpec(memory_space=pltpu.MemorySpace.VMEM),   # W_cat (~1 MiB bf16)
            pl.BlockSpec(memory_space=pltpu.MemorySpace.VMEM),   # x     (~16 KiB)
        ],
        out_specs=pl.BlockSpec(memory_space=pltpu.MemorySpace.VMEM),
        compiler_params=pltpu.CompilerParams(
            vmem_limit_bytes=8 * 1024 * 1024,              # actual footprint ~1.2 MiB
        ),
    )(w_cat, x_flat)
    return out_flat.reshape(N, C, D, H, W)


if __name__ == "__main__":
    key = jax.random.PRNGKey(0)
    kx, kw = jax.random.split(key)

    # Small shapes consistent with the module: N=2, C=4 channels, D=H=W=8 (F = 512).
    N, C, D, H, W = 2, 4, 8, 8, 8
    x = jax.random.normal(kx, (N, C, D, H, W), dtype=jnp.float32)
    conv_w = jax.random.normal(kw, (1, 2, KSIZE, KSIZE, KSIZE), dtype=jnp.float32) * 0.05

    # Operator built once per weight update, outside the forward pass.
    w_cat = jax.block_until_ready(build_spatial_attention_operator(conv_w, C, D, H, W))

    out = jax.block_until_ready(spatial_attention_3d(x, w_cat))

    # Pure-JAX reference (matches the PyTorch forward), full f32 precision.
    avg = jnp.mean(x, axis=1, keepdims=True)
    mx = jnp.max(x, axis=1, keepdims=True)
    att_in = jnp.concatenate([avg, mx], axis=1)
    conv = lax.conv_general_dilated(
        att_in, conv_w, window_strides=(1, 1, 1),
        padding=[(PAD, PAD)] * 3,
        dimension_numbers=("NCDHW", "OIDHW", "NCDHW"),
        precision=lax.Precision.HIGHEST)
    ref = jax.nn.sigmoid(conv) * x + x

    # Tolerance accounts for the bf16 operator/activation quantization of the 686-tap conv
    # (observed error ~1e-2 on the sigmoid-gated residual); the f32 path matched to ~1e-6.
    err = float(jnp.max(jnp.abs(out - ref)))
    assert jnp.allclose(out, ref, atol=5e-2, rtol=5e-2), f"max abs err {err}"
    print("KERNEL_OK")
</pallas_src>

<mosaic_0001>
module attributes {stable_mosaic.version = 11 : i64} {
  func.func @spatial_attention_kernel(%arg0: memref<1024x512xbf16, #tpu.memory_space<vmem>>, %arg1: memref<2x4x512xf32, #tpu.memory_space<vmem>>, %arg2: memref<2x4x512xf32, #tpu.memory_space<vmem>>) attributes {dimension_semantics = [], scalar_prefetch = 0 : i64, scratch_operands = 0 : i64, tpu.core_type = #tpu.core_type<tc>} {
    %c0 = arith.constant 0 : index
    %c0_0 = arith.constant 0 : index
    %c0_1 = arith.constant 0 : index
    %0 = vector.load %arg1[%c0, %c0_0, %c0_1] : memref<2x4x512xf32, #tpu.memory_space<vmem>>, vector<2x4x512xf32>
    %cst = arith.constant dense<0.000000e+00> : vector<2x512xf32>
    %1 = vector.multi_reduction <add>, %0, %cst [1] : vector<2x4x512xf32> to vector<2x512xf32>
    %cst_2 = arith.constant dense<0xFF800000> : vector<2x512xf32>
    %2 = vector.multi_reduction <maximumf>, %0, %cst_2 [1] : vector<2x4x512xf32> to vector<2x512xf32>
    %3 = tpu.concatenate %1, %2 in 1 : vector<2x512xf32>, vector<2x512xf32> -> vector<2x1024xf32>
    %4 = arith.truncf %3 : vector<2x1024xf32> to vector<2x1024xbf16>
    %c0_3 = arith.constant 0 : index
    %c0_4 = arith.constant 0 : index
    %5 = vector.load %arg0[%c0_3, %c0_4] : memref<1024x512xbf16, #tpu.memory_space<vmem>>, vector<1024x512xbf16>
    %cst_5 = arith.constant dense<0.000000e+00> : vector<2x512xf32>
    %6 = tpu.matmul %4, %5, %cst_5 {dimension_numbers = #tpu.dot_dimension_numbers<[1], [0], [0], [1], [0, 0, 1, 1], [], []>} : vector<2x1024xbf16>, vector<1024x512xbf16>, vector<2x512xf32> -> vector<2x512xf32>
    %7 = arith.negf %6 : vector<2x512xf32>
    %8 = math.exp %7 : vector<2x512xf32>
    %cst_6 = arith.constant 1.000000e+00 : f32
    %9 = vector.broadcast %cst_6 : f32 to vector<2x512xf32>
    %10 = arith.addf %9, %8 : vector<2x512xf32>
    %11 = arith.divf %9, %10 : vector<2x512xf32>
    %cst_7 = arith.constant 1.000000e+00 : f32
    %12 = vector.broadcast %cst_7 : f32 to vector<2x512xf32>
    %13 = arith.addf %11, %12 : vector<2x512xf32>
    %14 = vector.shape_cast %13 : vector<2x512xf32> to vector<2x1x512xf32>
    %15 = vector.broadcast %14 : vector<2x1x512xf32> to vector<2x4x512xf32>
    %16 = arith.mulf %0, %15 : vector<2x4x512xf32>
    %c0_8 = arith.constant 0 : index
    %c0_9 = arith.constant 0 : index
    %c0_10 = arith.constant 0 : index
    %17 = vector.load %arg2[%c0_8, %c0_9, %c0_10] : memref<2x4x512xf32, #tpu.memory_space<vmem>>, vector<2x4x512xf32>
    tpu.vector_store %arg2[%c0_8, %c0_9, %c0_10], %16 {strides = array<i32>} : memref<2x4x512xf32, #tpu.memory_space<vmem>>, vector<2x4x512xf32>,
    return
  }
}

</mosaic_0001>

<llo_original>
// kernel: spatial_attention_3d.1
$region0: #{spatial_attention_3d.1}
  #allocation0 [shape = 'u32[]', space=smem, size = 0x4, offset = 0x4, fixed_abs, tag = 'smem constant byte address 0x4 - core index']
  #allocation1 [shape = 'u32[144,128]{1,0:T(1,128)}', space=vmem, size = 0x12000, scoped, tag = 'internal scratch']
  %s0 = inlined_call_operand.hbm [shape: bf16[1024,512], index: 0, kind: input, shape index: {}]
  %s1 = inlined_call_operand.vmem [shape: f32[2,4,512], index: 1, kind: input, shape index: {}]
  %s2 = inlined_call_operand.vmem [shape: f32[2,4,512], index: 2, kind: output, shape index: {}]
  %s3 = sld [smem:[#allocation0]]
  $region22: #{spatial_attention_3d.1} parent=0
    _
  %s5 = ssub.s32 1, %s3
  %s6 = scalar_select 0, %s5, %s3
  $region1: #{spatial_attention_3d.1} parent=0
    #allocation2 [shape = 'u8[1048576]{0}', space=vmem, size = 0x100000, scoped, tag = 'input window, operand 0, single buffered']
    #allocation3 [shape = 's32[1]{0}', space=sflag, size = 0x4, scoped, tag = 'scoped memory for spatial_attention_3d.1']
    %7 = vsyncpa [#allocation3], 0
    // Predicated region
    $region2: #{spatial_attention_3d.1} parent=1 // pred_check
      _
    $region3: #{spatial_attention_3d.1} parent=1 // pred_check_branch
      %9 = sbr.rel (0) target = $region5
    $region4: #{spatial_attention_3d.1} parent=1 // pred_region
      %s11 = ssub.s32 32768, 32768
      %12 = vsyncadd [#allocation3], %s11
      %s13 = sshll.u32 [#allocation2], 4
      %s14 = int_to_ptr.vmem [resolvable:$true] %s13
      %19 = dma.hbm_to_vmem [thread:$0]  %s0, 32768, %s14, [#allocation3], 256, 256, 16
    $region5: #{spatial_attention_3d.1} parent=1 // pred_fallthru
      _
    // Predicated region
    $region6: #{spatial_attention_3d.1} parent=1 // pred_check
      _
    $region7: #{spatial_attention_3d.1} parent=1 // pred_check_branch
      %21 = sbr.rel (0) target = $region9
    $region8: #{spatial_attention_3d.1} parent=1 // pred_region
      _
    $region9: #{spatial_attention_3d.1} parent=1 // pred_fallthru
      _
    // Predicated region
    $region10: #{spatial_attention_3d.1} parent=1 // pred_check
      _
    $region11: #{spatial_attention_3d.1} parent=1 // pred_check_branch
      %23 = sbr.rel (0) target = $region13
    $region12: #{spatial_attention_3d.1} parent=1 // pred_region
      %24 = dma.done [#allocation3], 32768
    $region13: #{spatial_attention_3d.1} parent=1 // pred_fallthru
      _
    %v25 = vld [vmem:[%s1] sm:$0xff]
    %v26 = vld [vmem:[%s1 + $0x8] sm:$0xff]
    %v27 = vld [vmem:[%s1 + $0x10] sm:$0xff]
    %v28 = vld [vmem:[%s1 + $0x18] sm:$0xff]
    %v33 = vcombine.high %v25, %v25
    %v34 = vcombine.high %v26, %v26
    %v35 = vcombine.high %v27, %v27
    %v36 = vcombine.high %v28, %v28
    %vm41 = vcmask 1043456
    %v42 = vsel %vm41, %v25, 0.0
    %v43 = vrot.slane %v42, 4
    %v44 = vadd.f32 %v42, %v43
    %v45 = vrot.slane %v44, 2
    %v46 = vadd.f32 %v44, %v45
    %v47 = vrot.slane %v46, 1
    %v48 = vadd.f32 %v46, %v47
    %v49 = vsel %vm41, %v33, 0.0
    %v50 = vrot.slane %v49, 4
    %v51 = vadd.f32 %v49, %v50
    %v52 = vrot.slane %v51, 2
    %v53 = vadd.f32 %v51, %v52
    %v54 = vrot.slane %v53, 1
    %v55 = vadd.f32 %v53, %v54
    %v56 = vsel %vm41, %v26, 0.0
    %v57 = vrot.slane %v56, 4
    %v58 = vadd.f32 %v56, %v57
    %v59 = vrot.slane %v58, 2
    %v60 = vadd.f32 %v58, %v59
    %v61 = vrot.slane %v60, 1
    %v62 = vadd.f32 %v60, %v61
    %v63 = vsel %vm41, %v34, 0.0
    %v64 = vrot.slane %v63, 4
    %v65 = vadd.f32 %v63, %v64
    %v66 = vrot.slane %v65, 2
    %v67 = vadd.f32 %v65, %v66
    %v68 = vrot.slane %v67, 1
    %v69 = vadd.f32 %v67, %v68
    %v70 = vsel %vm41, %v27, 0.0
    %v71 = vrot.slane %v70, 4
    %v72 = vadd.f32 %v70, %v71
    %v73 = vrot.slane %v72, 2
    %v74 = vadd.f32 %v72, %v73
    %v75 = vrot.slane %v74, 1
    %v76 = vadd.f32 %v74, %v75
    %v77 = vsel %vm41, %v35, 0.0
    %v78 = vrot.slane %v77, 4
    %v79 = vadd.f32 %v77, %v78
    %v80 = vrot.slane %v79, 2
    %v81 = vadd.f32 %v79, %v80
    %v82 = vrot.slane %v81, 1
    %v83 = vadd.f32 %v81, %v82
    %v84 = vsel %vm41, %v28, 0.0
    %v85 = vrot.slane %v84, 4
    %v86 = vadd.f32 %v84, %v85
    %v87 = vrot.slane %v86, 2
    %v88 = vadd.f32 %v86, %v87
    %v89 = vrot.slane %v88, 1
    %v90 = vadd.f32 %v88, %v89
    %v91 = vsel %vm41, %v36, 0.0
    %v92 = vrot.slane %v91, 4
    %v93 = vadd.f32 %v91, %v92
    %v94 = vrot.slane %v93, 2
    %v95 = vadd.f32 %v93, %v94
    %v96 = vrot.slane %v95, 1
    %v97 = vadd.f32 %v95, %v96
    %v98 = vsel %vm41, %v25, -inf
    %v99 = vrot.slane %v98, 4
    %v100 = vmax.f32 %v98, %v99
    %v101 = vrot.slane %v100, 2
    %v102 = vmax.f32 %v100, %v101
    %v103 = vrot.slane %v102, 1
    %v104 = vmax.f32 %v102, %v103
    %v105 = vsel %vm41, %v33, -inf
    %v106 = vrot.slane %v105, 4
    %v107 = vmax.f32 %v105, %v106
    %v108 = vrot.slane %v107, 2
    %v109 = vmax.f32 %v107, %v108
    %v110 = vrot.slane %v109, 1
    %v111 = vmax.f32 %v109, %v110
    %v112 = vsel %vm41, %v26, -inf
    %v113 = vrot.slane %v112, 4
    %v114 = vmax.f32 %v112, %v113
    %v115 = vrot.slane %v114, 2
    %v116 = vmax.f32 %v114, %v115
    %v117 = vrot.slane %v116, 1
    %v118 = vmax.f32 %v116, %v117
    %v119 = vsel %vm41, %v34, -inf
    %v120 = vrot.slane %v119, 4
    %v121 = vmax.f32 %v119, %v120
    %v122 = vrot.slane %v121, 2
    %v123 = vmax.f32 %v121, %v122
    %v124 = vrot.slane %v123, 1
    %v125 = vmax.f32 %v123, %v124
    %v126 = vsel %vm41, %v27, -inf
    %v127 = vrot.slane %v126, 4
    %v128 = vmax.f32 %v126, %v127
    %v129 = vrot.slane %v128, 2
    %v130 = vmax.f32 %v128, %v129
    %v131 = vrot.slane %v130, 1
    %v132 = vmax.f32 %v130, %v131
    %v133 = vsel %vm41, %v35, -inf
    %v134 = vrot.slane %v133, 4
    %v135 = vmax.f32 %v133, %v134
    %v136 = vrot.slane %v135, 2
    %v137 = vmax.f32 %v135, %v136
    %v138 = vrot.slane %v137, 1
    %v139 = vmax.f32 %v137, %v138
    %v140 = vsel %vm41, %v28, -inf
    %v141 = vrot.slane %v140, 4
    %v142 = vmax.f32 %v140, %v141
    %v143 = vrot.slane %v142, 2
    %v144 = vmax.f32 %v142, %v143
    %v145 = vrot.slane %v144, 1
    %v146 = vmax.f32 %v144, %v145
    %v147 = vsel %vm41, %v36, -inf
    %v148 = vrot.slane %v147, 4
    %v149 = vmax.f32 %v147, %v148
    %v150 = vrot.slane %v149, 2
    %v151 = vmax.f32 %v149, %v150
    %v152 = vrot.slane %v151, 1
    %v153 = vmax.f32 %v151, %v152
    %vm162 = vcmask 1041409
    %v163 = vsel %vm162, %v76, %v48
    %v164 = vsel %vm162, %v83, %v55
    %v165 = vsel %vm162, %v90, %v62
    %v166 = vsel %vm162, %v97, %v69
    %v179 = vsel %vm162, %v132, %v104
    %v180 = vsel %vm162, %v139, %v111
    %v181 = vsel %vm162, %v146, %v118
    %v182 = vsel %vm162, %v153, %v125
    %v187 = vpack.c.bf16 %v163, %v163
    %v188 = vpack.c.bf16 %v164, %v164
    %v189 = vpack.c.bf16 %v165, %v165
    %v190 = vpack.c.bf16 %v166, %v166
    %v191 = vpack.c.bf16 %v179, %v179
    %v192 = vpack.c.bf16 %v180, %v180
    %v193 = vpack.c.bf16 %v181, %v181
    %v194 = vpack.c.bf16 %v182, %v182
    %v195 = vld [vmem:[#allocation2] sm:$0xff]
    %v196 = vld [vmem:[#allocation2 + $0x8] sm:$0xff]
    %v197 = vld [vmem:[#allocation2 + $0x10] sm:$0xff]
    %v198 = vld [vmem:[#allocation2 + $0x18] sm:$0xff]
    %v199 = vld [vmem:[#allocation2 + $0x20] sm:$0xff]
    %v200 = vld [vmem:[#allocation2 + $0x28] sm:$0xff]
    %v201 = vld [vmem:[#allocation2 + $0x30] sm:$0xff]
    %v202 = vld [vmem:[#allocation2 + $0x38] sm:$0xff]
    %v203 = vld [vmem:[#allocation2 + $0x40] sm:$0xff]
    %v204 = vld [vmem:[#allocation2 + $0x48] sm:$0xff]
    %v205 = vld [vmem:[#allocation2 + $0x50] sm:$0xff]
    %v206 = vld [vmem:[#allocation2 + $0x58] sm:$0xff]
    %v207 = vld [vmem:[#allocation2 + $0x60] sm:$0xff]
    %v208 = vld [vmem:[#allocation2 + $0x68] sm:$0xff]
    %v209 = vld [vmem:[#allocation2 + $0x70] sm:$0xff]
    %v210 = vld [vmem:[#allocation2 + $0x78] sm:$0xff]
    %v211 = vld [vmem:[#allocation2 + $0x80] sm:$0xff]
    %v212 = vld [vmem:[#allocation2 + $0x88] sm:$0xff]
    %v213 = vld [vmem:[#allocation2 + $0x90] sm:$0xff]
    %v214 = vld [vmem:[#allocation2 + $0x98] sm:$0xff]
    %v215 = vld [vmem:[#allocation2 + $0xa0] sm:$0xff]
    %v216 = vld [vmem:[#allocation2 + $0xa8] sm:$0xff]
    %v217 = vld [vmem:[#allocation2 + $0xb0] sm:$0xff]
    %v218 = vld [vmem:[#allocation2 + $0xb8] sm:$0xff]
    %v219 = vld [vmem:[#allocation2 + $0xc0] sm:$0xff]
    %v220 = vld [vmem:[#allocation2 + $0xc8] sm:$0xff]
    %v221 = vld [vmem:[#allocation2 + $0xd0] sm:$0xff]
    %v222 = vld [vmem:[#allocation2 + $0xd8] sm:$0xff]
    %v223 = vld [vmem:[#allocation2 + $0xe0] sm:$0xff]
    %v224 = vld [vmem:[#allocation2 + $0xe8] sm:$0xff]
    %v225 = vld [vmem:[#allocation2 + $0xf0] sm:$0xff]
    %v226 = vld [vmem:[#allocation2 + $0xf8] sm:$0xff]
    %v227 = vld [vmem:[#allocation2 + $0x100] sm:$0xff]
    %v228 = vld [vmem:[#allocation2 + $0x108] sm:$0xff]
    %v229 = vld [vmem:[#allocation2 + $0x110] sm:$0xff]
    %v230 = vld [vmem:[#allocation2 + $0x118] sm:$0xff]
    %v231 = vld [vmem:[#allocation2 + $0x120] sm:$0xff]
    %v232 = vld [vmem:[#allocation2 + $0x128] sm:$0xff]
    %v233 = vld [vmem:[#allocation2 + $0x130] sm:$0xff]
    %v234 = vld [vmem:[#allocation2 + $0x138] sm:$0xff]
    %v235 = vld [vmem:[#allocation2 + $0x140] sm:$0xff]
    %v236 = vld [vmem:[#allocation2 + $0x148] sm:$0xff]
    %v237 = vld [vmem:[#allocation2 + $0x150] sm:$0xff]
    %v238 = vld [vmem:[#allocation2 + $0x158] sm:$0xff]
    %v239 = vld [vmem:[#allocation2 + $0x160] sm:$0xff]
    %v240 = vld [vmem:[#allocation2 + $0x168] sm:$0xff]
    %v241 = vld [vmem:[#allocation2 + $0x170] sm:$0xff]
    %v242 = vld [vmem:[#allocation2 + $0x178] sm:$0xff]
    %v243 = vld [vmem:[#allocation2 + $0x180] sm:$0xff]
    %v244 = vld [vmem:[#allocation2 + $0x188] sm:$0xff]
    %v245 = vld [vmem:[#allocation2 + $0x190] sm:$0xff]
    %v246 = vld [vmem:[#allocation2 + $0x198] sm:$0xff]
    %v247 = vld [vmem:[#allocation2 + $0x1a0] sm:$0xff]
    %v248 = vld [vmem:[#allocation2 + $0x1a8] sm:$0xff]
    %v249 = vld [vmem:[#allocation2 + $0x1b0] sm:$0xff]
    %v250 = vld [vmem:[#allocation2 + $0x1b8] sm:$0xff]
    %v251 = vld [vmem:[#allocation2 + $0x1c0] sm:$0xff]
    %v252 = vld [vmem:[#allocation2 + $0x1c8] sm:$0xff]
    %v253 = vld [vmem:[#allocation2 + $0x1d0] sm:$0xff]
    %v254 = vld [vmem:[#allocation2 + $0x1d8] sm:$0xff]
    %v255 = vld [vmem:[#allocation2 + $0x1e0] sm:$0xff]
    %v256 = vld [vmem:[#allocation2 + $0x1e8] sm:$0xff]
    %v257 = vld [vmem:[#allocation2 + $0x1f0] sm:$0xff]
    %v258 = vld [vmem:[#allocation2 + $0x1f8] sm:$0xff]
    %v259 = vld [vmem:[#allocation2 + $0x200] sm:$0xff]
    %v260 = vld [vmem:[#allocation2 + $0x208] sm:$0xff]
    %v261 = vld [vmem:[#allocation2 + $0x210] sm:$0xff]
    %v262 = vld [vmem:[#allocation2 + $0x218] sm:$0xff]
    %v263 = vld [vmem:[#allocation2 + $0x220] sm:$0xff]
    %v264 = vld [vmem:[#allocation2 + $0x228] sm:$0xff]
    %v265 = vld [vmem:[#allocation2 + $0x230] sm:$0xff]
    %v266 = vld [vmem:[#allocation2 + $0x238] sm:$0xff]
    %v267 = vld [vmem:[#allocation2 + $0x240] sm:$0xff]
    %v268 = vld [vmem:[#allocation2 + $0x248] sm:$0xff]
    %v269 = vld [vmem:[#allocation2 + $0x250] sm:$0xff]
    %v270 = vld [vmem:[#allocation2 + $0x258] sm:$0xff]
    %v271 = vld [vmem:[#allocation2 + $0x260] sm:$0xff]
    %v272 = vld [vmem:[#allocation2 + $0x268] sm:$0xff]
    %v273 = vld [vmem:[#allocation2 + $0x270] sm:$0xff]
    %v274 = vld [vmem:[#allocation2 + $0x278] sm:$0xff]
    %v275 = vld [vmem:[#allocation2 + $0x280] sm:$0xff]
    %v276 = vld [vmem:[#allocation2 + $0x288] sm:$0xff]
    %v277 = vld [vmem:[#allocation2 + $0x290] sm:$0xff]
    %v278 = vld [vmem:[#allocation2 + $0x298] sm:$0xff]
    %v279 = vld [vmem:[#allocation2 + $0x2a0] sm:$0xff]
    %v280 = vld [vmem:[#allocation2 + $0x2a8] sm:$0xff]
    %v281 = vld [vmem:[#allocation2 + $0x2b0] sm:$0xff]
    %v282 = vld [vmem:[#allocation2 + $0x2b8] sm:$0xff]
    %v283 = vld [vmem:[#allocation2 + $0x2c0] sm:$0xff]
    %v284 = vld [vmem:[#allocation2 + $0x2c8] sm:$0xff]
    %v285 = vld [vmem:[#allocation2 + $0x2d0] sm:$0xff]
    %v286 = vld [vmem:[#allocation2 + $0x2d8] sm:$0xff]
    %v287 = vld [vmem:[#allocation2 + $0x2e0] sm:$0xff]
    %v288 = vld [vmem:[#allocation2 + $0x2e8] sm:$0xff]
    %v289 = vld [vmem:[#allocation2 + $0x2f0] sm:$0xff]
    %v290 = vld [vmem:[#allocation2 + $0x2f8] sm:$0xff]
    %v291 = vld [vmem:[#allocation2 + $0x300] sm:$0xff]
    %v292 = vld [vmem:[#allocation2 + $0x308] sm:$0xff]
    %v293 = vld [vmem:[#allocation2 + $0x310] sm:$0xff]
    %v294 = vld [vmem:[#allocation2 + $0x318] sm:$0xff]
    %v295 = vld [vmem:[#allocation2 + $0x320] sm:$0xff]
    %v296 = vld [vmem:[#allocation2 + $0x328] sm:$0xff]
    %v297 = vld [vmem:[#allocation2 + $0x330] sm:$0xff]
    %v298 = vld [vmem:[#allocation2 + $0x338] sm:$0xff]
    %v299 = vld [vmem:[#allocation2 + $0x340] sm:$0xff]
    %v300 = vld [vmem:[#allocation2 + $0x348] sm:$0xff]
    %v301 = vld [vmem:[#allocation2 + $0x350] sm:$0xff]
    %v302 = vld [vmem:[#allocation2 + $0x358] sm:$0xff]
    %v303 = vld [vmem:[#allocation2 + $0x360] sm:$0xff]
    %v304 = vld [vmem:[#allocation2 + $0x368] sm:$0xff]
    %v305 = vld [vmem:[#allocation2 + $0x370] sm:$0xff]
    %v306 = vld [vmem:[#allocation2 + $0x378] sm:$0xff]
    %v307 = vld [vmem:[#allocation2 + $0x380] sm:$0xff]
    %v308 = vld [vmem:[#allocation2 + $0x388] sm:$0xff]
    %v309 = vld [vmem:[#allocation2 + $0x390] sm:$0xff]
    %v310 = vld [vmem:[#allocation2 + $0x398] sm:$0xff]
    %v311 = vld [vmem:[#allocation2 + $0x3a0] sm:$0xff]
    %v312 = vld [vmem:[#allocation2 + $0x3a8] sm:$0xff]
    %v313 = vld [vmem:[#allocation2 + $0x3b0] sm:$0xff]
    %v314 = vld [vmem:[#allocation2 + $0x3b8] sm:$0xff]
    %v315 = vld [vmem:[#allocation2 + $0x3c0] sm:$0xff]
    %v316 = vld [vmem:[#allocation2 + $0x3c8] sm:$0xff]
    %v317 = vld [vmem:[#allocation2 + $0x3d0] sm:$0xff]
    %v318 = vld [vmem:[#allocation2 + $0x3d8] sm:$0xff]
    %v319 = vld [vmem:[#allocation2 + $0x3e0] sm:$0xff]
    %v320 = vld [vmem:[#allocation2 + $0x3e8] sm:$0xff]
    %v321 = vld [vmem:[#allocation2 + $0x3f0] sm:$0xff]
    %v322 = vld [vmem:[#allocation2 + $0x3f8] sm:$0xff]
    %v323 = vld [vmem:[#allocation2 + $0x400] sm:$0xff]
    %v324 = vld [vmem:[#allocation2 + $0x408] sm:$0xff]
    %v325 = vld [vmem:[#allocation2 + $0x410] sm:$0xff]
    %v326 = vld [vmem:[#allocation2 + $0x418] sm:$0xff]
    %v327 = vld [vmem:[#allocation2 + $0x420] sm:$0xff]
    %v328 = vld [vmem:[#allocation2 + $0x428] sm:$0xff]
    %v329 = vld [vmem:[#allocation2 + $0x430] sm:$0xff]
    %v330 = vld [vmem:[#allocation2 + $0x438] sm:$0xff]
    %v331 = vld [vmem:[#allocation2 + $0x440] sm:$0xff]
    %v332 = vld [vmem:[#allocation2 + $0x448] sm:$0xff]
    %v333 = vld [vmem:[#allocation2 + $0x450] sm:$0xff]
    %v334 = vld [vmem:[#allocation2 + $0x458] sm:$0xff]
    %v335 = vld [vmem:[#allocation2 + $0x460] sm:$0xff]
    %v336 = vld [vmem:[#allocation2 + $0x468] sm:$0xff]
    %v337 = vld [vmem:[#allocation2 + $0x470] sm:$0xff]
    %v338 = vld [vmem:[#allocation2 + $0x478] sm:$0xff]
    %v339 = vld [vmem:[#allocation2 + $0x480] sm:$0xff]
    %v340 = vld [vmem:[#allocation2 + $0x488] sm:$0xff]
    %v341 = vld [vmem:[#allocation2 + $0x490] sm:$0xff]
    %v342 = vld [vmem:[#allocation2 + $0x498] sm:$0xff]
    %v343 = vld [vmem:[#allocation2 + $0x4a0] sm:$0xff]
    %v344 = vld [vmem:[#allocation2 + $0x4a8] sm:$0xff]
    %v345 = vld [vmem:[#allocation2 + $0x4b0] sm:$0xff]
    %v346 = vld [vmem:[#allocation2 + $0x4b8] sm:$0xff]
    %v347 = vld [vmem:[#allocation2 + $0x4c0] sm:$0xff]
    %v348 = vld [vmem:[#allocation2 + $0x4c8] sm:$0xff]
    %v349 = vld [vmem:[#allocation2 + $0x4d0] sm:$0xff]
    %v350 = vld [vmem:[#allocation2 + $0x4d8] sm:$0xff]
    %v351 = vld [vmem:[#allocation2 + $0x4e0] sm:$0xff]
    %v352 = vld [vmem:[#allocation2 + $0x4e8] sm:$0xff]
    %v353 = vld [vmem:[#allocation2 + $0x4f0] sm:$0xff]
    %v354 = vld [vmem:[#allocation2 + $0x4f8] sm:$0xff]
    %v355 = vld [vmem:[#allocation2 + $0x500] sm:$0xff]
    %v356 = vld [vmem:[#allocation2 + $0x508] sm:$0xff]
    %v357 = vld [vmem:[#allocation2 + $0x510] sm:$0xff]
    %v358 = vld [vmem:[#allocation2 + $0x518] sm:$0xff]
    %v359 = vld [vmem:[#allocation2 + $0x520] sm:$0xff]
    %v360 = vld [vmem:[#allocation2 + $0x528] sm:$0xff]
    %v361 = vld [vmem:[#allocation2 + $0x530] sm:$0xff]
    %v362 = vld [vmem:[#allocation2 + $0x538] sm:$0xff]
    %v363 = vld [vmem:[#allocation2 + $0x540] sm:$0xff]
    %v364 = vld [vmem:[#allocation2 + $0x548] sm:$0xff]
    %v365 = vld [vmem:[#allocation2 + $0x550] sm:$0xff]
    %v366 = vld [vmem:[#allocation2 + $0x558] sm:$0xff]
    %v367 = vld [vmem:[#allocation2 + $0x560] sm:$0xff]
    %v368 = vld [vmem:[#allocation2 + $0x568] sm:$0xff]
    %v369 = vld [vmem:[#allocation2 + $0x570] sm:$0xff]
    %v370 = vld [vmem:[#allocation2 + $0x578] sm:$0xff]
    %v371 = vld [vmem:[#allocation2 + $0x580] sm:$0xff]
    %v372 = vld [vmem:[#allocation2 + $0x588] sm:$0xff]
    %v373 = vld [vmem:[#allocation2 + $0x590] sm:$0xff]
    %v374 = vld [vmem:[#allocation2 + $0x598] sm:$0xff]
    %v375 = vld [vmem:[#allocation2 + $0x5a0] sm:$0xff]
    %v376 = vld [vmem:[#allocation2 + $0x5a8] sm:$0xff]
    %v377 = vld [vmem:[#allocation2 + $0x5b0] sm:$0xff]
    %v378 = vld [vmem:[#allocation2 + $0x5b8] sm:$0xff]
    %v379 = vld [vmem:[#allocation2 + $0x5c0] sm:$0xff]
    %v380 = vld [vmem:[#allocation2 + $0x5c8] sm:$0xff]
    %v381 = vld [vmem:[#allocation2 + $0x5d0] sm:$0xff]
    %v382 = vld [vmem:[#allocation2 + $0x5d8] sm:$0xff]
    %v383 = vld [vmem:[#allocation2 + $0x5e0] sm:$0xff]
    %v384 = vld [vmem:[#allocation2 + $0x5e8] sm:$0xff]
    %v385 = vld [vmem:[#allocation2 + $0x5f0] sm:$0xff]
    %v386 = vld [vmem:[#allocation2 + $0x5f8] sm:$0xff]
    %v387 = vld [vmem:[#allocation2 + $0x600] sm:$0xff]
    %v388 = vld [vmem:[#allocation2 + $0x608] sm:$0xff]
    %v389 = vld [vmem:[#allocation2 + $0x610] sm:$0xff]
    %v390 = vld [vmem:[#allocation2 + $0x618] sm:$0xff]
    %v391 = vld [vmem:[#allocation2 + $0x620] sm:$0xff]
    %v392 = vld [vmem:[#allocation2 + $0x628] sm:$0xff]
    %v393 = vld [vmem:[#allocation2 + $0x630] sm:$0xff]
    %v394 = vld [vmem:[#allocation2 + $0x638] sm:$0xff]
    %v395 = vld [vmem:[#allocation2 + $0x640] sm:$0xff]
    %v396 = vld [vmem:[#allocation2 + $0x648] sm:$0xff]
    %v397 = vld [vmem:[#allocation2 + $0x650] sm:$0xff]
    %v398 = vld [vmem:[#allocation2 + $0x658] sm:$0xff]
    %v399 = vld [vmem:[#allocation2 + $0x660] sm:$0xff]
    %v400 = vld [vmem:[#allocation2 + $0x668] sm:$0xff]
    %v401 = vld [vmem:[#allocation2 + $0x670] sm:$0xff]
    %v402 = vld [vmem:[#allocation2 + $0x678] sm:$0xff]
    %v403 = vld [vmem:[#allocation2 + $0x680] sm:$0xff]
    %v404 = vld [vmem:[#allocation2 + $0x688] sm:$0xff]
    %v405 = vld [vmem:[#allocation2 + $0x690] sm:$0xff]
    %v406 = vld [vmem:[#allocation2 + $0x698] sm:$0xff]
    %v407 = vld [vmem:[#allocation2 + $0x6a0] sm:$0xff]
    %v408 = vld [vmem:[#allocation2 + $0x6a8] sm:$0xff]
    %v409 = vld [vmem:[#allocation2 + $0x6b0] sm:$0xff]
    %v410 = vld [vmem:[#allocation2 + $0x6b8] sm:$0xff]
    %v411 = vld [vmem:[#allocation2 + $0x6c0] sm:$0xff]
    %v412 = vld [vmem:[#allocation2 + $0x6c8] sm:$0xff]
    %v413 = vld [vmem:[#allocation2 + $0x6d0] sm:$0xff]
    %v414 = vld [vmem:[#allocation2 + $0x6d8] sm:$0xff]
    %v415 = vld [vmem:[#allocation2 + $0x6e0] sm:$0xff]
    %v416 = vld [vmem:[#allocation2 + $0x6e8] sm:$0xff]
    %v417 = vld [vmem:[#allocation2 + $0x6f0] sm:$0xff]
    %v418 = vld [vmem:[#allocation2 + $0x6f8] sm:$0xff]
    %v419 = vld [vmem:[#allocation2 + $0x700] sm:$0xff]
    %v420 = vld [vmem:[#allocation2 + $0x708] sm:$0xff]
    %v421 = vld [vmem:[#allocation2 + $0x710] sm:$0xff]
    %v422 = vld [vmem:[#allocation2 + $0x718] sm:$0xff]
    %v423 = vld [vmem:[#allocation2 + $0x720] sm:$0xff]
    %v424 = vld [vmem:[#allocation2 + $0x728] sm:$0xff]
    %v425 = vld [vmem:[#allocation2 + $0x730] sm:$0xff]
    %v426 = vld [vmem:[#allocation2 + $0x738] sm:$0xff]
    %v427 = vld [vmem:[#allocation2 + $0x740] sm:$0xff]
    %v428 = vld [vmem:[#allocation2 + $0x748] sm:$0xff]
    %v429 = vld [vmem:[#allocation2 + $0x750] sm:$0xff]
    %v430 = vld [vmem:[#allocation2 + $0x758] sm:$0xff]
    %v431 = vld [vmem:[#allocation2 + $0x760] sm:$0xff]
    %v432 = vld [vmem:[#allocation2 + $0x768] sm:$0xff]
    %v433 = vld [vmem:[#allocation2 + $0x770] sm:$0xff]
    %v434 = vld [vmem:[#allocation2 + $0x778] sm:$0xff]
    %v435 = vld [vmem:[#allocation2 + $0x780] sm:$0xff]
    %v436 = vld [vmem:[#allocation2 + $0x788] sm:$0xff]
    %v437 = vld [vmem:[#allocation2 + $0x790] sm:$0xff]
    %v438 = vld [vmem:[#allocation2 + $0x798] sm:$0xff]
    %v439 = vld [vmem:[#allocation2 + $0x7a0] sm:$0xff]
    %v440 = vld [vmem:[#allocation2 + $0x7a8] sm:$0xff]
    %v441 = vld [vmem:[#allocation2 + $0x7b0] sm:$0xff]
    %v442 = vld [vmem:[#allocation2 + $0x7b8] sm:$0xff]
    %v443 = vld [vmem:[#allocation2 + $0x7c0] sm:$0xff]
    %v444 = vld [vmem:[#allocation2 + $0x7c8] sm:$0xff]
    %v445 = vld [vmem:[#allocation2 + $0x7d0] sm:$0xff]
    %v446 = vld [vmem:[#allocation2 + $0x7d8] sm:$0xff]
    %v447 = vld [vmem:[#allocation2 + $0x7e0] sm:$0xff]
    %v448 = vld [vmem:[#allocation2 + $0x7e8] sm:$0xff]
    %v449 = vld [vmem:[#allocation2 + $0x7f0] sm:$0xff]
    %v450 = vld [vmem:[#allocation2 + $0x7f8] sm:$0xff]
    %v707 = vunpack.c.l.b16 %v195
    %v708 = vunpack.c.h.b16 %v195
    %v709 = vunpack.c.l.b16 %v196
    %v710 = vunpack.c.h.b16 %v196
    %v711 = vunpack.c.l.b16 %v197
    %v712 = vunpack.c.h.b16 %v197
    %v713 = vunpack.c.l.b16 %v198
    %v714 = vunpack.c.h.b16 %v198
    %v715 = vunpack.c.l.b16 %v199
    %v716 = vunpack.c.h.b16 %v199
    %v717 = vunpack.c.l.b16 %v200
    %v718 = vunpack.c.h.b16 %v200
    %v719 = vunpack.c.l.b16 %v201
    %v720 = vunpack.c.h.b16 %v201
    %v721 = vunpack.c.l.b16 %v202
    %v722 = vunpack.c.h.b16 %v202
    %v723 = vunpack.c.l.b16 %v203
    %v724 = vunpack.c.h.b16 %v203
    %v725 = vunpack.c.l.b16 %v204
    %v726 = vunpack.c.h.b16 %v204
    %v727 = vunpack.c.l.b16 %v205
    %v728 = vunpack.c.h.b16 %v205
    %v729 = vunpack.c.l.b16 %v206
    %v730 = vunpack.c.h.b16 %v206
    %v731 = vunpack.c.l.b16 %v207
    %v732 = vunpack.c.h.b16 %v207
    %v733 = vunpack.c.l.b16 %v208
    %v734 = vunpack.c.h.b16 %v208
    %v735 = vunpack.c.l.b16 %v209
    %v736 = vunpack.c.h.b16 %v209
    %v737 = vunpack.c.l.b16 %v210
    %v738 = vunpack.c.h.b16 %v210
    %v739 = vunpack.c.l.b16 %v211
    %v740 = vunpack.c.h.b16 %v211
    %v741 = vunpack.c.l.b16 %v212
    %v742 = vunpack.c.h.b16 %v212
    %v743 = vunpack.c.l.b16 %v213
    %v744 = vunpack.c.h.b16 %v213
    %v745 = vunpack.c.l.b16 %v214
    %v746 = vunpack.c.h.b16 %v214
    %v747 = vunpack.c.l.b16 %v215
    %v748 = vunpack.c.h.b16 %v215
    %v749 = vunpack.c.l.b16 %v216
    %v750 = vunpack.c.h.b16 %v216
    %v751 = vunpack.c.l.b16 %v217
    %v752 = vunpack.c.h.b16 %v217
    %v753 = vunpack.c.l.b16 %v218
    %v754 = vunpack.c.h.b16 %v218
    %v755 = vunpack.c.l.b16 %v219
    %v756 = vunpack.c.h.b16 %v219
    %v757 = vunpack.c.l.b16 %v220
    %v758 = vunpack.c.h.b16 %v220
    %v759 = vunpack.c.l.b16 %v221
    %v760 = vunpack.c.h.b16 %v221
    %v761 = vunpack.c.l.b16 %v222
    %v762 = vunpack.c.h.b16 %v222
    %v763 = vunpack.c.l.b16 %v223
    %v764 = vunpack.c.h.b16 %v223
    %v765 = vunpack.c.l.b16 %v224
    %v766 = vunpack.c.h.b16 %v224
    %v767 = vunpack.c.l.b16 %v225
    %v768 = vunpack.c.h.b16 %v225
    %v769 = vunpack.c.l.b16 %v226
    %v770 = vunpack.c.h.b16 %v226
    %v771 = vunpack.c.l.b16 %v227
    %v772 = vunpack.c.h.b16 %v227
    %v773 = vunpack.c.l.b16 %v228
    %v774 = vunpack.c.h.b16 %v228
    %v775 = vunpack.c.l.b16 %v229
    %v776 = vunpack.c.h.b16 %v229
    %v777 = vunpack.c.l.b16 %v230
    %v778 = vunpack.c.h.b16 %v230
    %v779 = vunpack.c.l.b16 %v231
    %v780 = vunpack.c.h.b16 %v231
    %v781 = vunpack.c.l.b16 %v232
    %v782 = vunpack.c.h.b16 %v232
    %v783 = vunpack.c.l.b16 %v233
    %v784 = vunpack.c.h.b16 %v233
    %v785 = vunpack.c.l.b16 %v234
    %v786 = vunpack.c.h.b16 %v234
    %v787 = vunpack.c.l.b16 %v235
    %v788 = vunpack.c.h.b16 %v235
    %v789 = vunpack.c.l.b16 %v236
    %v790 = vunpack.c.h.b16 %v236
    %v791 = vunpack.c.l.b16 %v237
    %v792 = vunpack.c.h.b16 %v237
    %v793 = vunpack.c.l.b16 %v238
    %v794 = vunpack.c.h.b16 %v238
    %v795 = vunpack.c.l.b16 %v239
    %v796 = vunpack.c.h.b16 %v239
    %v797 = vunpack.c.l.b16 %v240
    %v798 = vunpack.c.h.b16 %v240
    %v799 = vunpack.c.l.b16 %v241
    %v800 = vunpack.c.h.b16 %v241
    %v801 = vunpack.c.l.b16 %v242
    %v802 = vunpack.c.h.b16 %v242
    %v803 = vunpack.c.l.b16 %v243
    %v804 = vunpack.c.h.b16 %v243
    %v805 = vunpack.c.l.b16 %v244
    %v806 = vunpack.c.h.b16 %v244
    %v807 = vunpack.c.l.b16 %v245
    %v808 = vunpack.c.h.b16 %v245
    %v809 = vunpack.c.l.b16 %v246
    %v810 = vunpack.c.h.b16 %v246
    %v811 = vunpack.c.l.b16 %v247
    %v812 = vunpack.c.h.b16 %v247
    %v813 = vunpack.c.l.b16 %v248
    %v814 = vunpack.c.h.b16 %v248
    %v815 = vunpack.c.l.b16 %v249
    %v816 = vunpack.c.h.b16 %v249
    %v817 = vunpack.c.l.b16 %v250
    %v818 = vunpack.c.h.b16 %v250
    %v819 = vunpack.c.l.b16 %v251
    %v820 = vunpack.c.h.b16 %v251
    %v821 = vunpack.c.l.b16 %v252
    %v822 = vunpack.c.h.b16 %v252
    %v823 = vunpack.c.l.b16 %v253
    %v824 = vunpack.c.h.b16 %v253
    %v825 = vunpack.c.l.b16 %v254
    %v826 = vunpack.c.h.b16 %v254
    %v827 = vunpack.c.l.b16 %v255
    %v828 = vunpack.c.h.b16 %v255
    %v829 = vunpack.c.l.b16 %v256
    %v830 = vunpack.c.h.b16 %v256
    %v831 = vunpack.c.l.b16 %v257
    %v832 = vunpack.c.h.b16 %v257
    %v833 = vunpack.c.l.b16 %v258
    %v834 = vunpack.c.h.b16 %v258
    %v835 = vunpack.c.l.b16 %v259
    %v836 = vunpack.c.h.b16 %v259
    %v837 = vunpack.c.l.b16 %v260
    %v838 = vunpack.c.h.b16 %v260
    %v839 = vunpack.c.l.b16 %v261
    %v840 = vunpack.c.h.b16 %v261
    %v841 = vunpack.c.l.b16 %v262
    %v842 = vunpack.c.h.b16 %v262
    %v843 = vunpack.c.l.b16 %v263
    %v844 = vunpack.c.h.b16 %v263
    %v845 = vunpack.c.l.b16 %v264
    %v846 = vunpack.c.h.b16 %v264
    %v847 = vunpack.c.l.b16 %v265
    %v848 = vunpack.c.h.b16 %v265
    %v849 = vunpack.c.l.b16 %v266
    %v850 = vunpack.c.h.b16 %v266
    %v851 = vunpack.c.l.b16 %v267
    %v852 = vunpack.c.h.b16 %v267
    %v853 = vunpack.c.l.b16 %v268
    %v854 = vunpack.c.h.b16 %v268
    %v855 = vunpack.c.l.b16 %v269
    %v856 = vunpack.c.h.b16 %v269
    %v857 = vunpack.c.l.b16 %v270
    %v858 = vunpack.c.h.b16 %v270
    %v859 = vunpack.c.l.b16 %v271
    %v860 = vunpack.c.h.b16 %v271
    %v861 = vunpack.c.l.b16 %v272
    %v862 = vunpack.c.h.b16 %v272
    %v863 = vunpack.c.l.b16 %v273
    %v864 = vunpack.c.h.b16 %v273
    %v865 = vunpack.c.l.b16 %v274
    %v866 = vunpack.c.h.b16 %v274
    %v867 = vunpack.c.l.b16 %v275
    %v868 = vunpack.c.h.b16 %v275
    %v869 = vunpack.c.l.b16 %v276
    %v870 = vunpack.c.h.b16 %v276
    %v871 = vunpack.c.l.b16 %v277
    %v872 = vunpack.c.h.b16 %v277
    %v873 = vunpack.c.l.b16 %v278
    %v874 = vunpack.c.h.b16 %v278
    %v875 = vunpack.c.l.b16 %v279
    %v876 = vunpack.c.h.b16 %v279
    %v877 = vunpack.c.l.b16 %v280
    %v878 = vunpack.c.h.b16 %v280
    %v879 = vunpack.c.l.b16 %v281
    %v880 = vunpack.c.h.b16 %v281
    %v881 = vunpack.c.l.b16 %v282
    %v882 = vunpack.c.h.b16 %v282
    %v883 = vunpack.c.l.b16 %v283
    %v884 = vunpack.c.h.b16 %v283
    %v885 = vunpack.c.l.b16 %v284
    %v886 = vunpack.c.h.b16 %v284
    %v887 = vunpack.c.l.b16 %v285
    %v888 = vunpack.c.h.b16 %v285
    %v889 = vunpack.c.l.b16 %v286
    %v890 = vunpack.c.h.b16 %v286
    %v891 = vunpack.c.l.b16 %v287
    %v892 = vunpack.c.h.b16 %v287
    %v893 = vunpack.c.l.b16 %v288
    %v894 = vunpack.c.h.b16 %v288
    %v895 = vunpack.c.l.b16 %v289
    %v896 = vunpack.c.h.b16 %v289
    %v897 = vunpack.c.l.b16 %v290
    %v898 = vunpack.c.h.b16 %v290
    %v899 = vunpack.c.l.b16 %v291
    %v900 = vunpack.c.h.b16 %v291
    %v901 = vunpack.c.l.b16 %v292
    %v902 = vunpack.c.h.b16 %v292
    %v903 = vunpack.c.l.b16 %v293
    %v904 = vunpack.c.h.b16 %v293
    %v905 = vunpack.c.l.b16 %v294
    %v906 = vunpack.c.h.b16 %v294
    %v907 = vunpack.c.l.b16 %v295
    %v908 = vunpack.c.h.b16 %v295
    %v909 = vunpack.c.l.b16 %v296
    %v910 = vunpack.c.h.b16 %v296
    %v911 = vunpack.c.l.b16 %v297
    %v912 = vunpack.c.h.b16 %v297
    %v913 = vunpack.c.l.b16 %v298
    %v914 = vunpack.c.h.b16 %v298
    %v915 = vunpack.c.l.b16 %v299
    %v916 = vunpack.c.h.b16 %v299
    %v917 = vunpack.c.l.b16 %v300
    %v918 = vunpack.c.h.b16 %v300
    %v919 = vunpack.c.l.b16 %v301
    %v920 = vunpack.c.h.b16 %v301
    %v921 = vunpack.c.l.b16 %v302
    %v922 = vunpack.c.h.b16 %v302
    %v923 = vunpack.c.l.b16 %v303
    %v924 = vunpack.c.h.b16 %v303
    %v925 = vunpack.c.l.b16 %v304
    %v926 = vunpack.c.h.b16 %v304
    %v927 = vunpack.c.l.b16 %v305
    %v928 = vunpack.c.h.b16 %v305
    %v929 = vunpack.c.l.b16 %v306
    %v930 = vunpack.c.h.b16 %v306
    %v931 = vunpack.c.l.b16 %v307
    %v932 = vunpack.c.h.b16 %v307
    %v933 = vunpack.c.l.b16 %v308
    %v934 = vunpack.c.h.b16 %v308
    %v935 = vunpack.c.l.b16 %v309
    %v936 = vunpack.c.h.b16 %v309
    %v937 = vunpack.c.l.b16 %v310
    %v938 = vunpack.c.h.b16 %v310
    %v939 = vunpack.c.l.b16 %v311
    %v940 = vunpack.c.h.b16 %v311
    %v941 = vunpack.c.l.b16 %v312
    %v942 = vunpack.c.h.b16 %v312
    %v943 = vunpack.c.l.b16 %v313
    %v944 = vunpack.c.h.b16 %v313
    %v945 = vunpack.c.l.b16 %v314
    %v946 = vunpack.c.h.b16 %v314
    %v947 = vunpack.c.l.b16 %v315
    %v948 = vunpack.c.h.b16 %v315
    %v949 = vunpack.c.l.b16 %v316
    %v950 = vunpack.c.h.b16 %v316
    %v951 = vunpack.c.l.b16 %v317
    %v952 = vunpack.c.h.b16 %v317
    %v953 = vunpack.c.l.b16 %v318
    %v954 = vunpack.c.h.b16 %v318
    %v955 = vunpack.c.l.b16 %v319
    %v956 = vunpack.c.h.b16 %v319
    %v957 = vunpack.c.l.b16 %v320
    %v958 = vunpack.c.h.b16 %v320
    %v959 = vunpack.c.l.b16 %v321
    %v960 = vunpack.c.h.b16 %v321
    %v961 = vunpack.c.l.b16 %v322
    %v962 = vunpack.c.h.b16 %v322
    %v963 = vunpack.c.l.b16 %v323
    %v964 = vunpack.c.h.b16 %v323
    %v965 = vunpack.c.l.b16 %v324
    %v966 = vunpack.c.h.b16 %v324
    %v967 = vunpack.c.l.b16 %v325
    %v968 = vunpack.c.h.b16 %v325
    %v969 = vunpack.c.l.b16 %v326
    %v970 = vunpack.c.h.b16 %v326
    %v971 = vunpack.c.l.b16 %v327
    %v972 = vunpack.c.h.b16 %v327
    %v973 = vunpack.c.l.b16 %v328
    %v974 = vunpack.c.h.b16 %v328
    %v975 = vunpack.c.l.b16 %v329
    %v976 = vunpack.c.h.b16 %v329
    %v977 = vunpack.c.l.b16 %v330
    %v978 = vunpack.c.h.b16 %v330
    %v979 = vunpack.c.l.b16 %v331
    %v980 = vunpack.c.h.b16 %v331
    %v981 = vunpack.c.l.b16 %v332
    %v982 = vunpack.c.h.b16 %v332
    %v983 = vunpack.c.l.b16 %v333
    %v984 = vunpack.c.h.b16 %v333
    %v985 = vunpack.c.l.b16 %v334
    %v986 = vunpack.c.h.b16 %v334
    %v987 = vunpack.c.l.b16 %v335
    %v988 = vunpack.c.h.b16 %v335
    %v989 = vunpack.c.l.b16 %v336
    %v990 = vunpack.c.h.b16 %v336
    %v991 = vunpack.c.l.b16 %v337
    %v992 = vunpack.c.h.b16 %v337
    %v993 = vunpack.c.l.b16 %v338
    %v994 = vunpack.c.h.b16 %v338
    %v995 = vunpack.c.l.b16 %v339
    %v996 = vunpack.c.h.b16 %v339
    %v997 = vunpack.c.l.b16 %v340
    %v998 = vunpack.c.h.b16 %v340
    %v999 = vunpack.c.l.b16 %v341
    %v1000 = vunpack.c.h.b16 %v341
    %v1001 = vunpack.c.l.b16 %v342
    %v1002 = vunpack.c.h.b16 %v342
    %v1003 = vunpack.c.l.b16 %v343
    %v1004 = vunpack.c.h.b16 %v343
    %v1005 = vunpack.c.l.b16 %v344
    %v1006 = vunpack.c.h.b16 %v344
    %v1007 = vunpack.c.l.b16 %v345
    %v1008 = vunpack.c.h.b16 %v345
    %v1009 = vunpack.c.l.b16 %v346
    %v1010 = vunpack.c.h.b16 %v346
    %v1011 = vunpack.c.l.b16 %v347
    %v1012 = vunpack.c.h.b16 %v347
    %v1013 = vunpack.c.l.b16 %v348
    %v1014 = vunpack.c.h.b16 %v348
    %v1015 = vunpack.c.l.b16 %v349
    %v1016 = vunpack.c.h.b16 %v349
    %v1017 = vunpack.c.l.b16 %v350
    %v1018 = vunpack.c.h.b16 %v350
    %v1019 = vunpack.c.l.b16 %v351
    %v1020 = vunpack.c.h.b16 %v351
    %v1021 = vunpack.c.l.b16 %v352
    %v1022 = vunpack.c.h.b16 %v352
    %v1023 = vunpack.c.l.b16 %v353
    %v1024 = vunpack.c.h.b16 %v353
    %v1025 = vunpack.c.l.b16 %v354
    %v1026 = vunpack.c.h.b16 %v354
    %v1027 = vunpack.c.l.b16 %v355
    %v1028 = vunpack.c.h.b16 %v355
    %v1029 = vunpack.c.l.b16 %v356
    %v1030 = vunpack.c.h.b16 %v356
    %v1031 = vunpack.c.l.b16 %v357
    %v1032 = vunpack.c.h.b16 %v357
    %v1033 = vunpack.c.l.b16 %v358
    %v1034 = vunpack.c.h.b16 %v358
    %v1035 = vunpack.c.l.b16 %v359
    %v1036 = vunpack.c.h.b16 %v359
    %v1037 = vunpack.c.l.b16 %v360
    %v1038 = vunpack.c.h.b16 %v360
    %v1039 = vunpack.c.l.b16 %v361
    %v1040 = vunpack.c.h.b16 %v361
    %v1041 = vunpack.c.l.b16 %v362
    %v1042 = vunpack.c.h.b16 %v362
    %v1043 = vunpack.c.l.b16 %v363
    %v1044 = vunpack.c.h.b16 %v363
    %v1045 = vunpack.c.l.b16 %v364
    %v1046 = vunpack.c.h.b16 %v364
    %v1047 = vunpack.c.l.b16 %v365
    %v1048 = vunpack.c.h.b16 %v365
    %v1049 = vunpack.c.l.b16 %v366
    %v1050 = vunpack.c.h.b16 %v366
    %v1051 = vunpack.c.l.b16 %v367
    %v1052 = vunpack.c.h.b16 %v367
    %v1053 = vunpack.c.l.b16 %v368
    %v1054 = vunpack.c.h.b16 %v368
    %v1055 = vunpack.c.l.b16 %v369
    %v1056 = vunpack.c.h.b16 %v369
    %v1057 = vunpack.c.l.b16 %v370
    %v1058 = vunpack.c.h.b16 %v370
    %v1059 = vunpack.c.l.b16 %v371
    %v1060 = vunpack.c.h.b16 %v371
    %v1061 = vunpack.c.l.b16 %v372
    %v1062 = vunpack.c.h.b16 %v372
    %v1063 = vunpack.c.l.b16 %v373
    %v1064 = vunpack.c.h.b16 %v373
    %v1065 = vunpack.c.l.b16 %v374
    %v1066 = vunpack.c.h.b16 %v374
    %v1067 = vunpack.c.l.b16 %v375
    %v1068 = vunpack.c.h.b16 %v375
    %v1069 = vunpack.c.l.b16 %v376
    %v1070 = vunpack.c.h.b16 %v376
    %v1071 = vunpack.c.l.b16 %v377
    %v1072 = vunpack.c.h.b16 %v377
    %v1073 = vunpack.c.l.b16 %v378
    %v1074 = vunpack.c.h.b16 %v378
    %v1075 = vunpack.c.l.b16 %v379
    %v1076 = vunpack.c.h.b16 %v379
    %v1077 = vunpack.c.l.b16 %v380
    %v1078 = vunpack.c.h.b16 %v380
    %v1079 = vunpack.c.l.b16 %v381
    %v1080 = vunpack.c.h.b16 %v381
    %v1081 = vunpack.c.l.b16 %v382
    %v1082 = vunpack.c.h.b16 %v382
    %v1083 = vunpack.c.l.b16 %v383
    %v1084 = vunpack.c.h.b16 %v383
    %v1085 = vunpack.c.l.b16 %v384
    %v1086 = vunpack.c.h.b16 %v384
    %v1087 = vunpack.c.l.b16 %v385
    %v1088 = vunpack.c.h.b16 %v385
    %v1089 = vunpack.c.l.b16 %v386
    %v1090 = vunpack.c.h.b16 %v386
    %v1091 = vunpack.c.l.b16 %v387
    %v1092 = vunpack.c.h.b16 %v387
    %v1093 = vunpack.c.l.b16 %v388
    %v1094 = vunpack.c.h.b16 %v388
    %v1095 = vunpack.c.l.b16 %v389
    %v1096 = vunpack.c.h.b16 %v389
    %v1097 = vunpack.c.l.b16 %v390
    %v1098 = vunpack.c.h.b16 %v390
    %v1099 = vunpack.c.l.b16 %v391
    %v1100 = vunpack.c.h.b16 %v391
    %v1101 = vunpack.c.l.b16 %v392
    %v1102 = vunpack.c.h.b16 %v392
    %v1103 = vunpack.c.l.b16 %v393
    %v1104 = vunpack.c.h.b16 %v393
    %v1105 = vunpack.c.l.b16 %v394
    %v1106 = vunpack.c.h.b16 %v394
    %v1107 = vunpack.c.l.b16 %v395
    %v1108 = vunpack.c.h.b16 %v395
    %v1109 = vunpack.c.l.b16 %v396
    %v1110 = vunpack.c.h.b16 %v396
    %v1111 = vunpack.c.l.b16 %v397
    %v1112 = vunpack.c.h.b16 %v397
    %v1113 = vunpack.c.l.b16 %v398
    %v1114 = vunpack.c.h.b16 %v398
    %v1115 = vunpack.c.l.b16 %v399
    %v1116 = vunpack.c.h.b16 %v399
    %v1117 = vunpack.c.l.b16 %v400
    %v1118 = vunpack.c.h.b16 %v400
    %v1119 = vunpack.c.l.b16 %v401
    %v1120 = vunpack.c.h.b16 %v401
    %v1121 = vunpack.c.l.b16 %v402
    %v1122 = vunpack.c.h.b16 %v402
    %v1123 = vunpack.c.l.b16 %v403
    %v1124 = vunpack.c.h.b16 %v403
    %v1125 = vunpack.c.l.b16 %v404
    %v1126 = vunpack.c.h.b16 %v404
    %v1127 = vunpack.c.l.b16 %v405
    %v1128 = vunpack.c.h.b16 %v405
    %v1129 = vunpack.c.l.b16 %v406
    %v1130 = vunpack.c.h.b16 %v406
    %v1131 = vunpack.c.l.b16 %v407
    %v1132 = vunpack.c.h.b16 %v407
    %v1133 = vunpack.c.l.b16 %v408
    %v1134 = vunpack.c.h.b16 %v408
    %v1135 = vunpack.c.l.b16 %v409
    %v1136 = vunpack.c.h.b16 %v409
    %v1137 = vunpack.c.l.b16 %v410
    %v1138 = vunpack.c.h.b16 %v410
    %v1139 = vunpack.c.l.b16 %v411
    %v1140 = vunpack.c.h.b16 %v411
    %v1141 = vunpack.c.l.b16 %v412
    %v1142 = vunpack.c.h.b16 %v412
    %v1143 = vunpack.c.l.b16 %v413
    %v1144 = vunpack.c.h.b16 %v413
    %v1145 = vunpack.c.l.b16 %v414
    %v1146 = vunpack.c.h.b16 %v414
    %v1147 = vunpack.c.l.b16 %v415
    %v1148 = vunpack.c.h.b16 %v415
    %v1149 = vunpack.c.l.b16 %v416
    %v1150 = vunpack.c.h.b16 %v416
    %v1151 = vunpack.c.l.b16 %v417
    %v1152 = vunpack.c.h.b16 %v417
    %v1153 = vunpack.c.l.b16 %v418
    %v1154 = vunpack.c.h.b16 %v418
    %v1155 = vunpack.c.l.b16 %v419
    %v1156 = vunpack.c.h.b16 %v419
    %v1157 = vunpack.c.l.b16 %v420
    %v1158 = vunpack.c.h.b16 %v420
    %v1159 = vunpack.c.l.b16 %v421
    %v1160 = vunpack.c.h.b16 %v421
    %v1161 = vunpack.c.l.b16 %v422
    %v1162 = vunpack.c.h.b16 %v422
    %v1163 = vunpack.c.l.b16 %v423
    %v1164 = vunpack.c.h.b16 %v423
    %v1165 = vunpack.c.l.b16 %v424
    %v1166 = vunpack.c.h.b16 %v424
    %v1167 = vunpack.c.l.b16 %v425
    %v1168 = vunpack.c.h.b16 %v425
    %v1169 = vunpack.c.l.b16 %v426
    %v1170 = vunpack.c.h.b16 %v426
    %v1171 = vunpack.c.l.b16 %v427
    %v1172 = vunpack.c.h.b16 %v427
    %v1173 = vunpack.c.l.b16 %v428
    %v1174 = vunpack.c.h.b16 %v428
    %v1175 = vunpack.c.l.b16 %v429
    %v1176 = vunpack.c.h.b16 %v429
    %v1177 = vunpack.c.l.b16 %v430
    %v1178 = vunpack.c.h.b16 %v430
    %v1179 = vunpack.c.l.b16 %v431
    %v1180 = vunpack.c.h.b16 %v431
    %v1181 = vunpack.c.l.b16 %v432
    %v1182 = vunpack.c.h.b16 %v432
    %v1183 = vunpack.c.l.b16 %v433
    %v1184 = vunpack.c.h.b16 %v433
    %v1185 = vunpack.c.l.b16 %v434
    %v1186 = vunpack.c.h.b16 %v434
    %v1187 = vunpack.c.l.b16 %v435
    %v1188 = vunpack.c.h.b16 %v435
    %v1189 = vunpack.c.l.b16 %v436
    %v1190 = vunpack.c.h.b16 %v436
    %v1191 = vunpack.c.l.b16 %v437
    %v1192 = vunpack.c.h.b16 %v437
    %v1193 = vunpack.c.l.b16 %v438
    %v1194 = vunpack.c.h.b16 %v438
    %v1195 = vunpack.c.l.b16 %v439
    %v1196 = vunpack.c.h.b16 %v439
    %v1197 = vunpack.c.l.b16 %v440
    %v1198 = vunpack.c.h.b16 %v440
    %v1199 = vunpack.c.l.b16 %v441
    %v1200 = vunpack.c.h.b16 %v441
    %v1201 = vunpack.c.l.b16 %v442
    %v1202 = vunpack.c.h.b16 %v442
    %v1203 = vunpack.c.l.b16 %v443
    %v1204 = vunpack.c.h.b16 %v443
    %v1205 = vunpack.c.l.b16 %v444
    %v1206 = vunpack.c.h.b16 %v444
    %v1207 = vunpack.c.l.b16 %v445
    %v1208 = vunpack.c.h.b16 %v445
    %v1209 = vunpack.c.l.b16 %v446
    %v1210 = vunpack.c.h.b16 %v446
    %v1211 = vunpack.c.l.b16 %v447
    %v1212 = vunpack.c.h.b16 %v447
    %v1213 = vunpack.c.l.b16 %v448
    %v1214 = vunpack.c.h.b16 %v448
    %v1215 = vunpack.c.l.b16 %v449
    %v1216 = vunpack.c.h.b16 %v449
    %v1217 = vunpack.c.l.b16 %v450
    %v1218 = vunpack.c.h.b16 %v450
    %v1219 = vpack.c.b16 %v711, %v707
    %v1220 = vpack.c.b16 %v712, %v708
    %v1221 = vpack.c.b16 %v713, %v709
    %v1222 = vpack.c.b16 %v714, %v710
    %v1223 = vpack.c.b16 %v719, %v715
    %v1224 = vpack.c.b16 %v720, %v716
    %v1225 = vpack.c.b16 %v721, %v717
    %v1226 = vpack.c.b16 %v722, %v718
    %v1227 = vpack.c.b16 %v727, %v723
    %v1228 = vpack.c.b16 %v728, %v724
    %v1229 = vpack.c.b16 %v729, %v725
    %v1230 = vpack.c.b16 %v730, %v726
    %v1231 = vpack.c.b16 %v735, %v731
    %v1232 = vpack.c.b16 %v736, %v732
    %v1233 = vpack.c.b16 %v737, %v733
    %v1234 = vpack.c.b16 %v738, %v734
    %v1235 = vpack.c.b16 %v743, %v739
    %v1236 = vpack.c.b16 %v744, %v740
    %v1237 = vpack.c.b16 %v745, %v741
    %v1238 = vpack.c.b16 %v746, %v742
    %v1239 = vpack.c.b16 %v751, %v747
    %v1240 = vpack.c.b16 %v752, %v748
    %v1241 = vpack.c.b16 %v753, %v749
    %v1242 = vpack.c.b16 %v754, %v750
    %v1243 = vpack.c.b16 %v759, %v755
    %v1244 = vpack.c.b16 %v760, %v756
    %v1245 = vpack.c.b16 %v761, %v757
    %v1246 = vpack.c.b16 %v762, %v758
    %v1247 = vpack.c.b16 %v767, %v763
    %v1248 = vpack.c.b16 %v768, %v764
    %v1249 = vpack.c.b16 %v769, %v765
    %v1250 = vpack.c.b16 %v770, %v766
    %v1251 = vpack.c.b16 %v775, %v771
    %v1252 = vpack.c.b16 %v776, %v772
    %v1253 = vpack.c.b16 %v777, %v773
    %v1254 = vpack.c.b16 %v778, %v774
    %v1255 = vpack.c.b16 %v783, %v779
    %v1256 = vpack.c.b16 %v784, %v780
    %v1257 = vpack.c.b16 %v785, %v781
    %v1258 = vpack.c.b16 %v786, %v782
    %v1259 = vpack.c.b16 %v791, %v787
    %v1260 = vpack.c.b16 %v792, %v788
    %v1261 = vpack.c.b16 %v793, %v789
    %v1262 = vpack.c.b16 %v794, %v790
    %v1263 = vpack.c.b16 %v799, %v795
    %v1264 = vpack.c.b16 %v800, %v796
    %v1265 = vpack.c.b16 %v801, %v797
    %v1266 = vpack.c.b16 %v802, %v798
    %v1267 = vpack.c.b16 %v807, %v803
    %v1268 = vpack.c.b16 %v808, %v804
    %v1269 = vpack.c.b16 %v809, %v805
    %v1270 = vpack.c.b16 %v810, %v806
    %v1271 = vpack.c.b16 %v815, %v811
    %v1272 = vpack.c.b16 %v816, %v812
    %v1273 = vpack.c.b16 %v817, %v813
    %v1274 = vpack.c.b16 %v818, %v814
    %v1275 = vpack.c.b16 %v823, %v819
    %v1276 = vpack.c.b16 %v824, %v820
    %v1277 = vpack.c.b16 %v825, %v821
    %v1278 = vpack.c.b16 %v826, %v822
    %v1279 = vpack.c.b16 %v831, %v827
    %v1280 = vpack.c.b16 %v832, %v828
    %v1281 = vpack.c.b16 %v833, %v829
    %v1282 = vpack.c.b16 %v834, %v830
    %v1283 = vpack.c.b16 %v839, %v835
    %v1284 = vpack.c.b16 %v840, %v836
    %v1285 = vpack.c.b16 %v841, %v837
    %v1286 = vpack.c.b16 %v842, %v838
    %v1287 = vpack.c.b16 %v847, %v843
    %v1288 = vpack.c.b16 %v848, %v844
    %v1289 = vpack.c.b16 %v849, %v845
    %v1290 = vpack.c.b16 %v850, %v846
    %v1291 = vpack.c.b16 %v855, %v851
    %v1292 = vpack.c.b16 %v856, %v852
    %v1293 = vpack.c.b16 %v857, %v853
    %v1294 = vpack.c.b16 %v858, %v854
    %v1295 = vpack.c.b16 %v863, %v859
    %v1296 = vpack.c.b16 %v864, %v860
    %v1297 = vpack.c.b16 %v865, %v861
    %v1298 = vpack.c.b16 %v866, %v862
    %v1299 = vpack.c.b16 %v871, %v867
    %v1300 = vpack.c.b16 %v872, %v868
    %v1301 = vpack.c.b16 %v873, %v869
    %v1302 = vpack.c.b16 %v874, %v870
    %v1303 = vpack.c.b16 %v879, %v875
    %v1304 = vpack.c.b16 %v880, %v876
    %v1305 = vpack.c.b16 %v881, %v877
    %v1306 = vpack.c.b16 %v882, %v878
    %v1307 = vpack.c.b16 %v887, %v883
    %v1308 = vpack.c.b16 %v888, %v884
    %v1309 = vpack.c.b16 %v889, %v885
    %v1310 = vpack.c.b16 %v890, %v886
    %v1311 = vpack.c.b16 %v895, %v891
    %v1312 = vpack.c.b16 %v896, %v892
    %v1313 = vpack.c.b16 %v897, %v893
    %v1314 = vpack.c.b16 %v898, %v894
    %v1315 = vpack.c.b16 %v903, %v899
    %v1316 = vpack.c.b16 %v904, %v900
    %v1317 = vpack.c.b16 %v905, %v901
    %v1318 = vpack.c.b16 %v906, %v902
    %v1319 = vpack.c.b16 %v911, %v907
    %v1320 = vpack.c.b16 %v912, %v908
    %v1321 = vpack.c.b16 %v913, %v909
    %v1322 = vpack.c.b16 %v914, %v910
    %v1323 = vpack.c.b16 %v919, %v915
    %v1324 = vpack.c.b16 %v920, %v916
    %v1325 = vpack.c.b16 %v921, %v917
    %v1326 = vpack.c.b16 %v922, %v918
    %v1327 = vpack.c.b16 %v927, %v923
    %v1328 = vpack.c.b16 %v928, %v924
    %v1329 = vpack.c.b16 %v929, %v925
    %v1330 = vpack.c.b16 %v930, %v926
    %v1331 = vpack.c.b16 %v935, %v931
    %v1332 = vpack.c.b16 %v936, %v932
    %v1333 = vpack.c.b16 %v937, %v933
    %v1334 = vpack.c.b16 %v938, %v934
    %v1335 = vpack.c.b16 %v943, %v939
    %v1336 = vpack.c.b16 %v944, %v940
    %v1337 = vpack.c.b16 %v945, %v941
    %v1338 = vpack.c.b16 %v946, %v942
    %v1339 = vpack.c.b16 %v951, %v947
    %v1340 = vpack.c.b16 %v952, %v948
    %v1341 = vpack.c.b16 %v953, %v949
    %v1342 = vpack.c.b16 %v954, %v950
    %v1343 = vpack.c.b16 %v959, %v955
    %v1344 = vpack.c.b16 %v960, %v956
    %v1345 = vpack.c.b16 %v961, %v957
    %v1346 = vpack.c.b16 %v962, %v958
    %v1347 = vpack.c.b16 %v967, %v963
    %v1348 = vpack.c.b16 %v968, %v964
    %v1349 = vpack.c.b16 %v969, %v965
    %v1350 = vpack.c.b16 %v970, %v966
    %v1351 = vpack.c.b16 %v975, %v971
    %v1352 = vpack.c.b16 %v976, %v972
    %v1353 = vpack.c.b16 %v977, %v973
    %v1354 = vpack.c.b16 %v978, %v974
    %v1355 = vpack.c.b16 %v983, %v979
    %v1356 = vpack.c.b16 %v984, %v980
    %v1357 = vpack.c.b16 %v985, %v981
    %v1358 = vpack.c.b16 %v986, %v982
    %v1359 = vpack.c.b16 %v991, %v987
    %v1360 = vpack.c.b16 %v992, %v988
    %v1361 = vpack.c.b16 %v993, %v989
    %v1362 = vpack.c.b16 %v994, %v990
    %v1363 = vpack.c.b16 %v999, %v995
    %v1364 = vpack.c.b16 %v1000, %v996
    %v1365 = vpack.c.b16 %v1001, %v997
    %v1366 = vpack.c.b16 %v1002, %v998
    %v1367 = vpack.c.b16 %v1007, %v1003
    %v1368 = vpack.c.b16 %v1008, %v1004
    %v1369 = vpack.c.b16 %v1009, %v1005
    %v1370 = vpack.c.b16 %v1010, %v1006
    %v1371 = vpack.c.b16 %v1015, %v1011
    %v1372 = vpack.c.b16 %v1016, %v1012
    %v1373 = vpack.c.b16 %v1017, %v1013
    %v1374 = vpack.c.b16 %v1018, %v1014
    %v1375 = vpack.c.b16 %v1023, %v1019
    %v1376 = vpack.c.b16 %v1024, %v1020
    %v1377 = vpack.c.b16 %v1025, %v1021
    %v1378 = vpack.c.b16 %v1026, %v1022
    %v1379 = vpack.c.b16 %v1031, %v1027
    %v1380 = vpack.c.b16 %v1032, %v1028
    %v1381 = vpack.c.b16 %v1033, %v1029
    %v1382 = vpack.c.b16 %v1034, %v1030
    %v1383 = vpack.c.b16 %v1039, %v1035
    %v1384 = vpack.c.b16 %v1040, %v1036
    %v1385 = vpack.c.b16 %v1041, %v1037
    %v1386 = vpack.c.b16 %v1042, %v1038
    %v1387 = vpack.c.b16 %v1047, %v1043
    %v1388 = vpack.c.b16 %v1048, %v1044
    %v1389 = vpack.c.b16 %v1049, %v1045
    %v1390 = vpack.c.b16 %v1050, %v1046
    %v1391 = vpack.c.b16 %v1055, %v1051
    %v1392 = vpack.c.b16 %v1056, %v1052
    %v1393 = vpack.c.b16 %v1057, %v1053
    %v1394 = vpack.c.b16 %v1058, %v1054
    %v1395 = vpack.c.b16 %v1063, %v1059
    %v1396 = vpack.c.b16 %v1064, %v1060
    %v1397 = vpack.c.b16 %v1065, %v1061
    %v1398 = vpack.c.b16 %v1066, %v1062
    %v1399 = vpack.c.b16 %v1071, %v1067
    %v1400 = vpack.c.b16 %v1072, %v1068
    %v1401 = vpack.c.b16 %v1073, %v1069
    %v1402 = vpack.c.b16 %v1074, %v1070
    %v1403 = vpack.c.b16 %v1079, %v1075
    %v1404 = vpack.c.b16 %v1080, %v1076
    %v1405 = vpack.c.b16 %v1081, %v1077
    %v1406 = vpack.c.b16 %v1082, %v1078
    %v1407 = vpack.c.b16 %v1087, %v1083
    %v1408 = vpack.c.b16 %v1088, %v1084
    %v1409 = vpack.c.b16 %v1089, %v1085
    %v1410 = vpack.c.b16 %v1090, %v1086
    %v1411 = vpack.c.b16 %v1095, %v1091
    %v1412 = vpack.c.b16 %v1096, %v1092
    %v1413 = vpack.c.b16 %v1097, %v1093
    %v1414 = vpack.c.b16 %v1098, %v1094
    %v1415 = vpack.c.b16 %v1103, %v1099
    %v1416 = vpack.c.b16 %v1104, %v1100
    %v1417 = vpack.c.b16 %v1105, %v1101
    %v1418 = vpack.c.b16 %v1106, %v1102
    %v1419 = vpack.c.b16 %v1111, %v1107
    %v1420 = vpack.c.b16 %v1112, %v1108
    %v1421 = vpack.c.b16 %v1113, %v1109
    %v1422 = vpack.c.b16 %v1114, %v1110
    %v1423 = vpack.c.b16 %v1119, %v1115
    %v1424 = vpack.c.b16 %v1120, %v1116
    %v1425 = vpack.c.b16 %v1121, %v1117
    %v1426 = vpack.c.b16 %v1122, %v1118
    %v1427 = vpack.c.b16 %v1127, %v1123
    %v1428 = vpack.c.b16 %v1128, %v1124
    %v1429 = vpack.c.b16 %v1129, %v1125
    %v1430 = vpack.c.b16 %v1130, %v1126
    %v1431 = vpack.c.b16 %v1135, %v1131
    %v1432 = vpack.c.b16 %v1136, %v1132
    %v1433 = vpack.c.b16 %v1137, %v1133
    %v1434 = vpack.c.b16 %v1138, %v1134
    %v1435 = vpack.c.b16 %v1143, %v1139
    %v1436 = vpack.c.b16 %v1144, %v1140
    %v1437 = vpack.c.b16 %v1145, %v1141
    %v1438 = vpack.c.b16 %v1146, %v1142
    %v1439 = vpack.c.b16 %v1151, %v1147
    %v1440 = vpack.c.b16 %v1152, %v1148
    %v1441 = vpack.c.b16 %v1153, %v1149
    %v1442 = vpack.c.b16 %v1154, %v1150
    %v1443 = vpack.c.b16 %v1159, %v1155
    %v1444 = vpack.c.b16 %v1160, %v1156
    %v1445 = vpack.c.b16 %v1161, %v1157
    %v1446 = vpack.c.b16 %v1162, %v1158
    %v1447 = vpack.c.b16 %v1167, %v1163
    %v1448 = vpack.c.b16 %v1168, %v1164
    %v1449 = vpack.c.b16 %v1169, %v1165
    %v1450 = vpack.c.b16 %v1170, %v1166
    %v1451 = vpack.c.b16 %v1175, %v1171
    %v1452 = vpack.c.b16 %v1176, %v1172
    %v1453 = vpack.c.b16 %v1177, %v1173
    %v1454 = vpack.c.b16 %v1178, %v1174
    %v1455 = vpack.c.b16 %v1183, %v1179
    %v1456 = vpack.c.b16 %v1184, %v1180
    %v1457 = vpack.c.b16 %v1185, %v1181
    %v1458 = vpack.c.b16 %v1186, %v1182
    %v1459 = vpack.c.b16 %v1191, %v1187
    %v1460 = vpack.c.b16 %v1192, %v1188
    %v1461 = vpack.c.b16 %v1193, %v1189
    %v1462 = vpack.c.b16 %v1194, %v1190
    %v1463 = vpack.c.b16 %v1199, %v1195
    %v1464 = vpack.c.b16 %v1200, %v1196
    %v1465 = vpack.c.b16 %v1201, %v1197
    %v1466 = vpack.c.b16 %v1202, %v1198
    %v1467 = vpack.c.b16 %v1207, %v1203
    %v1468 = vpack.c.b16 %v1208, %v1204
    %v1469 = vpack.c.b16 %v1209, %v1205
    %v1470 = vpack.c.b16 %v1210, %v1206
    %v1471 = vpack.c.b16 %v1215, %v1211
    %v1472 = vpack.c.b16 %v1216, %v1212
    %v1473 = vpack.c.b16 %v1217, %v1213
    %v1474 = vpack.c.b16 %v1218, %v1214
    %1731 = vmatprep.subr.bf16.mxu0 %v1248
    %1732 = vmatpush1.bf16.msra.mxu0 %v1247
    %1733 = vmatprep.subr.bf16.mxu0 %v1244
    %1734 = vmatpush1.bf16.msra.mxu0 %v1243
    %1735 = vmatprep.subr.bf16.mxu0 %v1240
    %1736 = vmatpush1.bf16.msra.mxu0 %v1239
    %1737 = vmatprep.subr.bf16.mxu0 %v1236
    %1738 = vmatpush1.bf16.msra.mxu0 %v1235
    %1739 = vmatprep.subr.bf16.mxu0 %v1232
    %1740 = vmatpush1.bf16.msra.mxu0 %v1231
    %1741 = vmatprep.subr.bf16.mxu0 %v1228
    %1742 = vmatpush1.bf16.msra.mxu0 %v1227
    %1743 = vmatprep.subr.bf16.mxu0 %v1224
    %1744 = vmatpush1.bf16.msra.mxu0 %v1223
    %1745 = vmatprep.subr.bf16.mxu0 %v1220
    %1746 = vmatpush1.bf16.msra.mxu0 %v1219
    %1747 = vmatprep.subr.bf16.mxu0 %v1280
    %1748 = vmatpush2.bf16.msra.mxu0 %v1279
    %1749 = vmatprep.subr.bf16.mxu0 %v1276
    %1750 = vmatpush2.bf16.msra.mxu0 %v1275
    %1751 = vmatprep.subr.bf16.mxu0 %v1272
    %1752 = vmatpush2.bf16.msra.mxu0 %v1271
    %1753 = vmatprep.subr.bf16.mxu0 %v1268
    %1754 = vmatpush2.bf16.msra.mxu0 %v1267
    %1755 = vmatprep.subr.bf16.mxu0 %v1264
    %1756 = vmatpush2.bf16.msra.mxu0 %v1263
    %1757 = vmatprep.subr.bf16.mxu0 %v1260
    %1758 = vmatpush2.bf16.msra.mxu0 %v1259
    %1759 = vmatprep.subr.bf16.mxu0 %v1256
    %1760 = vmatpush2.bf16.msra.mxu0 %v1255
    %1761 = vmatprep.subr.bf16.mxu0 %v1252
    %1762 = vmatpush2.bf16.msra.mxu0 %v1251
    %1763 = vmatprep.mubr.bf16.mxu0 %v188
    %1764 = vmatmul.mubr.bf16.gmra.mxu0 %v187
    %v1765 = vpop.f32.mrf.mxu0
    %v1766 = vadd.f32 0.0, %v1765
    %v1767 = vpop.f32.mrf.mxu0
    %v1768 = vadd.f32 0.0, %v1767
    %v1769 = vpop.f32.mrf.mxu0
    %v1770 = vpop.f32.mrf.mxu0
    %1771 = vdwg.mxu0
    %1772 = vmatprep.subr.bf16.mxu0 %v1312
    %1773 = vmatpush1.bf16.msra.mxu0 %v1311
    %1774 = vmatprep.subr.bf16.mxu0 %v1308
    %1775 = vmatpush1.bf16.msra.mxu0 %v1307
    %1776 = vmatprep.subr.bf16.mxu0 %v1304
    %1777 = vmatpush1.bf16.msra.mxu0 %v1303
    %1778 = vmatprep.subr.bf16.mxu0 %v1300
    %1779 = vmatpush1.bf16.msra.mxu0 %v1299
    %1780 = vmatprep.subr.bf16.mxu0 %v1296
    %1781 = vmatpush1.bf16.msra.mxu0 %v1295
    %1782 = vmatprep.subr.bf16.mxu0 %v1292
    %1783 = vmatpush1.bf16.msra.mxu0 %v1291
    %1784 = vmatprep.subr.bf16.mxu0 %v1288
    %1785 = vmatpush1.bf16.msra.mxu0 %v1287
    %1786 = vmatprep.subr.bf16.mxu0 %v1284
    %1787 = vmatpush1.bf16.msra.mxu0 %v1283
    %1788 = vmatprep.subr.bf16.mxu0 %v1344
    %1789 = vmatpush2.bf16.msra.mxu0 %v1343
    %1790 = vmatprep.subr.bf16.mxu0 %v1340
    %1791 = vmatpush2.bf16.msra.mxu0 %v1339
    %1792 = vmatprep.subr.bf16.mxu0 %v1336
    %1793 = vmatpush2.bf16.msra.mxu0 %v1335
    %1794 = vmatprep.subr.bf16.mxu0 %v1332
    %1795 = vmatpush2.bf16.msra.mxu0 %v1331
    %1796 = vmatprep.subr.bf16.mxu0 %v1328
    %1797 = vmatpush2.bf16.msra.mxu0 %v1327
    %1798 = vmatprep.subr.bf16.mxu0 %v1324
    %1799 = vmatpush2.bf16.msra.mxu0 %v1323
    %1800 = vmatprep.subr.bf16.mxu0 %v1320
    %1801 = vmatpush2.bf16.msra.mxu0 %v1319
    %1802 = vmatprep.subr.bf16.mxu0 %v1316
    %1803 = vmatpush2.bf16.msra.mxu0 %v1315
    %1804 = vmatprep.mubr.bf16.mxu0 %v190
    %1805 = vmatmul.mubr.bf16.gmra.mxu0 %v189
    %v1806 = vpop.f32.mrf.mxu0
    %v1807 = vadd.f32 %v1766, %v1806
    %v1808 = vpop.f32.mrf.mxu0
    %v1809 = vadd.f32 %v1768, %v1808
    %v1810 = vpop.f32.mrf.mxu0
    %v1811 = vpop.f32.mrf.mxu0
    %1812 = vdwg.mxu0
    %1813 = vmatprep.subr.bf16.mxu0 %v1376
    %1814 = vmatpush1.bf16.msra.mxu0 %v1375
    %1815 = vmatprep.subr.bf16.mxu0 %v1372
    %1816 = vmatpush1.bf16.msra.mxu0 %v1371
    %1817 = vmatprep.subr.bf16.mxu0 %v1368
    %1818 = vmatpush1.bf16.msra.mxu0 %v1367
    %1819 = vmatprep.subr.bf16.mxu0 %v1364
    %1820 = vmatpush1.bf16.msra.mxu0 %v1363
    %1821 = vmatprep.subr.bf16.mxu0 %v1360
    %1822 = vmatpush1.bf16.msra.mxu0 %v1359
    %1823 = vmatprep.subr.bf16.mxu0 %v1356
    %1824 = vmatpush1.bf16.msra.mxu0 %v1355
    %1825 = vmatprep.subr.bf16.mxu0 %v1352
    %1826 = vmatpush1.bf16.msra.mxu0 %v1351
    %1827 = vmatprep.subr.bf16.mxu0 %v1348
    %1828 = vmatpush1.bf16.msra.mxu0 %v1347
    %1829 = vmatprep.subr.bf16.mxu0 %v1408
    %1830 = vmatpush2.bf16.msra.mxu0 %v1407
    %1831 = vmatprep.subr.bf16.mxu0 %v1404
    %1832 = vmatpush2.bf16.msra.mxu0 %v1403
    %1833 = vmatprep.subr.bf16.mxu0 %v1400
    %1834 = vmatpush2.bf16.msra.mxu0 %v1399
    %1835 = vmatprep.subr.bf16.mxu0 %v1396
    %1836 = vmatpush2.bf16.msra.mxu0 %v1395
    %1837 = vmatprep.subr.bf16.mxu0 %v1392
    %1838 = vmatpush2.bf16.msra.mxu0 %v1391
    %1839 = vmatprep.subr.bf16.mxu0 %v1388
    %1840 = vmatpush2.bf16.msra.mxu0 %v1387
    %1841 = vmatprep.subr.bf16.mxu0 %v1384
    %1842 = vmatpush2.bf16.msra.mxu0 %v1383
    %1843 = vmatprep.subr.bf16.mxu0 %v1380
    %1844 = vmatpush2.bf16.msra.mxu0 %v1379
    %1845 = vmatprep.mubr.bf16.mxu0 %v192
    %1846 = vmatmul.mubr.bf16.gmra.mxu0 %v191
    %v1847 = vpop.f32.mrf.mxu0
    %v1848 = vadd.f32 %v1807, %v1847
    %v1849 = vpop.f32.mrf.mxu0
    %v1850 = vadd.f32 %v1809, %v1849
    %v1851 = vpop.f32.mrf.mxu0
    %v1852 = vpop.f32.mrf.mxu0
    %1853 = vdwg.mxu0
    %1854 = vmatprep.subr.bf16.mxu0 %v1440
    %1855 = vmatpush1.bf16.msra.mxu0 %v1439
    %1856 = vmatprep.subr.bf16.mxu0 %v1436
    %1857 = vmatpush1.bf16.msra.mxu0 %v1435
    %1858 = vmatprep.subr.bf16.mxu0 %v1432
    %1859 = vmatpush1.bf16.msra.mxu0 %v1431
    %1860 = vmatprep.subr.bf16.mxu0 %v1428
    %1861 = vmatpush1.bf16.msra.mxu0 %v1427
    %1862 = vmatprep.subr.bf16.mxu0 %v1424
    %1863 = vmatpush1.bf16.msra.mxu0 %v1423
    %1864 = vmatprep.subr.bf16.mxu0 %v1420
    %1865 = vmatpush1.bf16.msra.mxu0 %v1419
    %1866 = vmatprep.subr.bf16.mxu0 %v1416
    %1867 = vmatpush1.bf16.msra.mxu0 %v1415
    %1868 = vmatprep.subr.bf16.mxu0 %v1412
    %1869 = vmatpush1.bf16.msra.mxu0 %v1411
    %1870 = vmatprep.subr.bf16.mxu0 %v1472
    %1871 = vmatpush2.bf16.msra.mxu0 %v1471
    %1872 = vmatprep.subr.bf16.mxu0 %v1468
    %1873 = vmatpush2.bf16.msra.mxu0 %v1467
    %1874 = vmatprep.subr.bf16.mxu0 %v1464
    %1875 = vmatpush2.bf16.msra.mxu0 %v1463
    %1876 = vmatprep.subr.bf16.mxu0 %v1460
    %1877 = vmatpush2.bf16.msra.mxu0 %v1459
    %1878 = vmatprep.subr.bf16.mxu0 %v1456
    %1879 = vmatpush2.bf16.msra.mxu0 %v1455
    %1880 = vmatprep.subr.bf16.mxu0 %v1452
    %1881 = vmatpush2.bf16.msra.mxu0 %v1451
    %1882 = vmatprep.subr.bf16.mxu0 %v1448
    %1883 = vmatpush2.bf16.msra.mxu0 %v1447
    %1884 = vmatprep.subr.bf16.mxu0 %v1444
    %1885 = vmatpush2.bf16.msra.mxu0 %v1443
    %1886 = vmatprep.mubr.bf16.mxu0 %v194
    %1887 = vmatmul.mubr.bf16.gmra.mxu0 %v193
    %v1888 = vpop.f32.mrf.mxu0
    %v1889 = vadd.f32 %v1848, %v1888
    %v1890 = vpop.f32.mrf.mxu0
    %v1891 = vadd.f32 %v1850, %v1890
    %v1892 = vpop.f32.mrf.mxu0
    %v1893 = vpop.f32.mrf.mxu0
    %1894 = vdwg.mxu0
    %1895 = vmatprep.subr.bf16.mxu0 %v1250
    %1896 = vmatpush1.bf16.msra.mxu0 %v1249
    %1897 = vmatprep.subr.bf16.mxu0 %v1246
    %1898 = vmatpush1.bf16.msra.mxu0 %v1245
    %1899 = vmatprep.subr.bf16.mxu0 %v1242
    %1900 = vmatpush1.bf16.msra.mxu0 %v1241
    %1901 = vmatprep.subr.bf16.mxu0 %v1238
    %1902 = vmatpush1.bf16.msra.mxu0 %v1237
    %1903 = vmatprep.subr.bf16.mxu0 %v1234
    %1904 = vmatpush1.bf16.msra.mxu0 %v1233
    %1905 = vmatprep.subr.bf16.mxu0 %v1230
    %1906 = vmatpush1.bf16.msra.mxu0 %v1229
    %1907 = vmatprep.subr.bf16.mxu0 %v1226
    %1908 = vmatpush1.bf16.msra.mxu0 %v1225
    %1909 = vmatprep.subr.bf16.mxu0 %v1222
    %1910 = vmatpush1.bf16.msra.mxu0 %v1221
    %1911 = vmatprep.subr.bf16.mxu0 %v1282
    %1912 = vmatpush2.bf16.msra.mxu0 %v1281
    %1913 = vmatprep.subr.bf16.mxu0 %v1278
    %1914 = vmatpush2.bf16.msra.mxu0 %v1277
    %1915 = vmatprep.subr.bf16.mxu0 %v1274
    %1916 = vmatpush2.bf16.msra.mxu0 %v1273
    %1917 = vmatprep.subr.bf16.mxu0 %v1270
    %1918 = vmatpush2.bf16.msra.mxu0 %v1269
    %1919 = vmatprep.subr.bf16.mxu0 %v1266
    %1920 = vmatpush2.bf16.msra.mxu0 %v1265
    %1921 = vmatprep.subr.bf16.mxu0 %v1262
    %1922 = vmatpush2.bf16.msra.mxu0 %v1261
    %1923 = vmatprep.subr.bf16.mxu0 %v1258
    %1924 = vmatpush2.bf16.msra.mxu0 %v1257
    %1925 = vmatprep.subr.bf16.mxu0 %v1254
    %1926 = vmatpush2.bf16.msra.mxu0 %v1253
    %1927 = vmatprep.mubr.bf16.mxu0 %v188
    %1928 = vmatmul.mubr.bf16.gmra.mxu0 %v187
    %v1929 = vpop.f32.mrf.mxu0
    %v1930 = vadd.f32 0.0, %v1929
    %v1931 = vpop.f32.mrf.mxu0
    %v1932 = vadd.f32 0.0, %v1931
    %v1933 = vpop.f32.mrf.mxu0
    %v1934 = vpop.f32.mrf.mxu0
    %1935 = vdwg.mxu0
    %1936 = vmatprep.subr.bf16.mxu0 %v1314
    %1937 = vmatpush1.bf16.msra.mxu0 %v1313
    %1938 = vmatprep.subr.bf16.mxu0 %v1310
    %1939 = vmatpush1.bf16.msra.mxu0 %v1309
    %1940 = vmatprep.subr.bf16.mxu0 %v1306
    %1941 = vmatpush1.bf16.msra.mxu0 %v1305
    %1942 = vmatprep.subr.bf16.mxu0 %v1302
    %1943 = vmatpush1.bf16.msra.mxu0 %v1301
    %1944 = vmatprep.subr.bf16.mxu0 %v1298
    %1945 = vmatpush1.bf16.msra.mxu0 %v1297
    %1946 = vmatprep.subr.bf16.mxu0 %v1294
    %1947 = vmatpush1.bf16.msra.mxu0 %v1293
    %1948 = vmatprep.subr.bf16.mxu0 %v1290
    %1949 = vmatpush1.bf16.msra.mxu0 %v1289
    %1950 = vmatprep.subr.bf16.mxu0 %v1286
    %1951 = vmatpush1.bf16.msra.mxu0 %v1285
    %1952 = vmatprep.subr.bf16.mxu0 %v1346
    %1953 = vmatpush2.bf16.msra.mxu0 %v1345
    %1954 = vmatprep.subr.bf16.mxu0 %v1342
    %1955 = vmatpush2.bf16.msra.mxu0 %v1341
    %1956 = vmatprep.subr.bf16.mxu0 %v1338
    %1957 = vmatpush2.bf16.msra.mxu0 %v1337
    %1958 = vmatprep.subr.bf16.mxu0 %v1334
    %1959 = vmatpush2.bf16.msra.mxu0 %v1333
    %1960 = vmatprep.subr.bf16.mxu0 %v1330
    %1961 = vmatpush2.bf16.msra.mxu0 %v1329
    %1962 = vmatprep.subr.bf16.mxu0 %v1326
    %1963 = vmatpush2.bf16.msra.mxu0 %v1325
    %1964 = vmatprep.subr.bf16.mxu0 %v1322
    %1965 = vmatpush2.bf16.msra.mxu0 %v1321
    %1966 = vmatprep.subr.bf16.mxu0 %v1318
    %1967 = vmatpush2.bf16.msra.mxu0 %v1317
    %1968 = vmatprep.mubr.bf16.mxu0 %v190
    %1969 = vmatmul.mubr.bf16.gmra.mxu0 %v189
    %v1970 = vpop.f32.mrf.mxu0
    %v1971 = vadd.f32 %v1930, %v1970
    %v1972 = vpop.f32.mrf.mxu0
    %v1973 = vadd.f32 %v1932, %v1972
    %v1974 = vpop.f32.mrf.mxu0
    %v1975 = vpop.f32.mrf.mxu0
    %1976 = vdwg.mxu0
    %1977 = vmatprep.subr.bf16.mxu0 %v1378
    %1978 = vmatpush1.bf16.msra.mxu0 %v1377
    %1979 = vmatprep.subr.bf16.mxu0 %v1374
    %1980 = vmatpush1.bf16.msra.mxu0 %v1373
    %1981 = vmatprep.subr.bf16.mxu0 %v1370
    %1982 = vmatpush1.bf16.msra.mxu0 %v1369
    %1983 = vmatprep.subr.bf16.mxu0 %v1366
    %1984 = vmatpush1.bf16.msra.mxu0 %v1365
    %1985 = vmatprep.subr.bf16.mxu0 %v1362
    %1986 = vmatpush1.bf16.msra.mxu0 %v1361
    %1987 = vmatprep.subr.bf16.mxu0 %v1358
    %1988 = vmatpush1.bf16.msra.mxu0 %v1357
    %1989 = vmatprep.subr.bf16.mxu0 %v1354
    %1990 = vmatpush1.bf16.msra.mxu0 %v1353
    %1991 = vmatprep.subr.bf16.mxu0 %v1350
    %1992 = vmatpush1.bf16.msra.mxu0 %v1349
    %1993 = vmatprep.subr.bf16.mxu0 %v1410
    %1994 = vmatpush2.bf16.msra.mxu0 %v1409
    %1995 = vmatprep.subr.bf16.mxu0 %v1406
    %1996 = vmatpush2.bf16.msra.mxu0 %v1405
    %1997 = vmatprep.subr.bf16.mxu0 %v1402
    %1998 = vmatpush2.bf16.msra.mxu0 %v1401
    %1999 = vmatprep.subr.bf16.mxu0 %v1398
    %2000 = vmatpush2.bf16.msra.mxu0 %v1397
    %2001 = vmatprep.subr.bf16.mxu0 %v1394
    %2002 = vmatpush2.bf16.msra.mxu0 %v1393
    %2003 = vmatprep.subr.bf16.mxu0 %v1390
    %2004 = vmatpush2.bf16.msra.mxu0 %v1389
    %2005 = vmatprep.subr.bf16.mxu0 %v1386
    %2006 = vmatpush2.bf16.msra.mxu0 %v1385
    %2007 = vmatprep.subr.bf16.mxu0 %v1382
    %2008 = vmatpush2.bf16.msra.mxu0 %v1381
    %2009 = vmatprep.mubr.bf16.mxu0 %v192
    %2010 = vmatmul.mubr.bf16.gmra.mxu0 %v191
    %v2011 = vpop.f32.mrf.mxu0
    %v2012 = vadd.f32 %v1971, %v2011
    %v2013 = vpop.f32.mrf.mxu0
    %v2014 = vadd.f32 %v1973, %v2013
    %v2015 = vpop.f32.mrf.mxu0
    %v2016 = vpop.f32.mrf.mxu0
    %2017 = vdwg.mxu0
    %2018 = vmatprep.subr.bf16.mxu0 %v1442
    %2019 = vmatpush1.bf16.msra.mxu0 %v1441
    %2020 = vmatprep.subr.bf16.mxu0 %v1438
    %2021 = vmatpush1.bf16.msra.mxu0 %v1437
    %2022 = vmatprep.subr.bf16.mxu0 %v1434
    %2023 = vmatpush1.bf16.msra.mxu0 %v1433
    %2024 = vmatprep.subr.bf16.mxu0 %v1430
    %2025 = vmatpush1.bf16.msra.mxu0 %v1429
    %2026 = vmatprep.subr.bf16.mxu0 %v1426
    %2027 = vmatpush1.bf16.msra.mxu0 %v1425
    %2028 = vmatprep.subr.bf16.mxu0 %v1422
    %2029 = vmatpush1.bf16.msra.mxu0 %v1421
    %2030 = vmatprep.subr.bf16.mxu0 %v1418
    %2031 = vmatpush1.bf16.msra.mxu0 %v1417
    %2032 = vmatprep.subr.bf16.mxu0 %v1414
    %2033 = vmatpush1.bf16.msra.mxu0 %v1413
    %2034 = vmatprep.subr.bf16.mxu0 %v1474
    %2035 = vmatpush2.bf16.msra.mxu0 %v1473
    %2036 = vmatprep.subr.bf16.mxu0 %v1470
    %2037 = vmatpush2.bf16.msra.mxu0 %v1469
    %2038 = vmatprep.subr.bf16.mxu0 %v1466
    %2039 = vmatpush2.bf16.msra.mxu0 %v1465
    %2040 = vmatprep.subr.bf16.mxu0 %v1462
    %2041 = vmatpush2.bf16.msra.mxu0 %v1461
    %2042 = vmatprep.subr.bf16.mxu0 %v1458
    %2043 = vmatpush2.bf16.msra.mxu0 %v1457
    %2044 = vmatprep.subr.bf16.mxu0 %v1454
    %2045 = vmatpush2.bf16.msra.mxu0 %v1453
    %2046 = vmatprep.subr.bf16.mxu0 %v1450
    %2047 = vmatpush2.bf16.msra.mxu0 %v1449
    %2048 = vmatprep.subr.bf16.mxu0 %v1446
    %2049 = vmatpush2.bf16.msra.mxu0 %v1445
    %2050 = vmatprep.mubr.bf16.mxu0 %v194
    %2051 = vmatmul.mubr.bf16.gmra.mxu0 %v193
    %v2052 = vpop.f32.mrf.mxu0
    %v2053 = vadd.f32 %v2012, %v2052
    %v2054 = vpop.f32.mrf.mxu0
    %v2055 = vadd.f32 %v2014, %v2054
    %v2056 = vpop.f32.mrf.mxu0
    %v2057 = vpop.f32.mrf.mxu0
    %2058 = vdwg.mxu0
    %v2059 = vxor.u32 %v1889, 2147483648
    %v2060 = vxor.u32 %v1891, 2147483648
    %v2061 = vxor.u32 %v2053, 2147483648
    %v2062 = vxor.u32 %v2055, 2147483648
    %v2063 = vmul.f32 %v2059, 1.442695
    %v2064 = vpow.pop %v2063
    %v2065 = vmul.f32 %v2060, 1.442695
    %v2066 = vpow.pop %v2065
    %v2067 = vmul.f32 %v2061, 1.442695
    %v2068 = vpow.pop %v2067
    %v2069 = vmul.f32 %v2062, 1.442695
    %v2070 = vpow.pop %v2069
    %v2071 = vadd.f32 %v2064, 1.0
    %v2072 = vadd.f32 %v2066, 1.0
    %v2073 = vadd.f32 %v2068, 1.0
    %v2074 = vadd.f32 %v2070, 1.0
    %v2075 = vrcp.pop %v2071
    %v2076 = vmul.f32 1.0, %v2075
    %v2077 = vrcp.pop %v2072
    %v2078 = vmul.f32 1.0, %v2077
    %v2079 = vrcp.pop %v2073
    %v2080 = vmul.f32 1.0, %v2079
    %v2081 = vrcp.pop %v2074
    %v2082 = vmul.f32 1.0, %v2081
    %v2083 = vadd.f32 %v2076, 1.0
    %v2084 = vadd.f32 %v2078, 1.0
    %v2085 = vadd.f32 %v2080, 1.0
    %v2086 = vadd.f32 %v2082, 1.0
    %v2091 = vcombine.low %v2083, %v2084
    %v2092 = vcombine.low %v2085, %v2086
    %v2094 = vunpack.c.l.s4 1966171168
    %v2095 = vunpack.c.0.s8 %v2094
    %v2096 = vlaneseq
    %v2097 = vshrl.u32 %v2096, 7
    %v2098 = vsub.s32 %v2095, %v2097
    %v2099 = vrot.slane %v2091, %v2098
    %v2101 = vunpack.c.l.s4 1966171168
    %v2102 = vunpack.c.0.s8 %v2101
    %v2103 = vlaneseq
    %v2104 = vshrl.u32 %v2103, 7
    %v2105 = vsub.s32 %v2102, %v2104
    %v2106 = vrot.slane %v2092, %v2105
    %v2107 = vcombine.low %v2099, %v2106
    %v2108 = vcombine.high %v2099, %v2106
    %v2110 = vunpack.c.l.s4 1966171168
    %v2111 = vunpack.c.0.s8 %v2110
    %v2112 = vlaneseq
    %v2113 = vshrl.u32 %v2112, 7
    %v2114 = vsub.s32 %v2111, %v2113
    %v2115 = vrot.slane %v2107, %v2114
    %v2117 = vunpack.c.l.s4 1966171168
    %v2118 = vunpack.c.0.s8 %v2117
    %v2119 = vlaneseq
    %v2120 = vshrl.u32 %v2119, 7
    %v2121 = vsub.s32 %v2118, %v2120
    %v2122 = vrot.slane %v2108, %v2121
    %v2123 = vlaneseq
    %v2124 = vshrl.u32 %v2123, 7
    %v2125 = vsub.s32 0, %v2124
    %v2126 = vrot.slane %v2115, %v2125
    %v2127 = vlaneseq
    %v2128 = vshrl.u32 %v2127, 7
    %v2129 = vsub.s32 1, %v2128
    %v2130 = vrot.slane %v2115, %v2129
    %v2131 = vlaneseq
    %v2132 = vshrl.u32 %v2131, 7
    %v2133 = vsub.s32 2, %v2132
    %v2134 = vrot.slane %v2115, %v2133
    %v2135 = vlaneseq
    %v2136 = vshrl.u32 %v2135, 7
    %v2137 = vsub.s32 3, %v2136
    %v2138 = vrot.slane %v2115, %v2137
    %v2139 = vlaneseq
    %v2140 = vshrl.u32 %v2139, 7
    %v2141 = vsub.s32 0, %v2140
    %v2142 = vrot.slane %v2122, %v2141
    %v2143 = vlaneseq
    %v2144 = vshrl.u32 %v2143, 7
    %v2145 = vsub.s32 1, %v2144
    %v2146 = vrot.slane %v2122, %v2145
    %v2147 = vlaneseq
    %v2148 = vshrl.u32 %v2147, 7
    %v2149 = vsub.s32 2, %v2148
    %v2150 = vrot.slane %v2122, %v2149
    %v2151 = vlaneseq
    %v2152 = vshrl.u32 %v2151, 7
    %v2153 = vsub.s32 3, %v2152
    %v2154 = vrot.slane %v2122, %v2153
    %v2155 = vcombine.low %v2126, %v2130
    %v2156 = vcombine.low %v2134, %v2138
    %v2157 = vcombine.low %v2142, %v2146
    %v2158 = vcombine.low %v2150, %v2154
    %v2163 = vmul.f32 %v25, %v2155
    %v2164 = vmul.f32 %v26, %v2156
    %v2165 = vmul.f32 %v27, %v2157
    %v2166 = vmul.f32 %v28, %v2158
    %2167 = vst [vmem:[%s2] sm:$0xff] %v2163
    %2168 = vst [vmem:[%s2 + $0x8] sm:$0xff] %v2164
    %2169 = vst [vmem:[%s2 + $0x10] sm:$0xff] %v2165
    %2170 = vst [vmem:[%s2 + $0x18] sm:$0xff] %v2166
    // Predicated region
    $region14: #{spatial_attention_3d.1} parent=1 // pred_check
      _
    $region15: #{spatial_attention_3d.1} parent=1 // pred_check_branch
      %2172 = sbr.rel (0) target = $region17
    $region16: #{spatial_attention_3d.1} parent=1 // pred_region
      _
    $region17: #{spatial_attention_3d.1} parent=1 // pred_fallthru
      _
    // Predicated region
    $region18: #{spatial_attention_3d.1} parent=1 // pred_check
      _
    $region19: #{spatial_attention_3d.1} parent=1 // pred_check_branch
      %2174 = sbr.rel (0) target = $region21
    $region20: #{spatial_attention_3d.1} parent=1 // pred_region
      _
    $region21: #{spatial_attention_3d.1} parent=1 // pred_fallthru
      _
    %2175 = vsyncpa [#allocation3], 1

</llo_original>
